<compile_context>
chip_gen: v7x
topology: tpu7x:2x2x1
jax: 0.10.0
libtpu: 0.0.40
codegen_flags: <defaults>
</compile_context>

<pallas_src>
import jax
import jax.numpy as jnp
from jax.experimental import pallas as pl
from jax.experimental.pallas import tpu as pltpu


def _round_up(x, m):
    return (x + m - 1) // m * m


# ---------------------------------------------------------------------------
# Parameter initialization (deterministic, mimics nn.Linear default init:
# U(-1/sqrt(in_dim), 1/sqrt(in_dim)) for both weight and bias).
# ---------------------------------------------------------------------------
def init_linear(key, in_dim, out_dim, dtype=jnp.float32):
    kw, kb = jax.random.split(key)
    bound = 1.0 / (in_dim ** 0.5)
    # Stored as (in_dim, out_dim) so the kernel does  h @ W + b  directly
    # (PyTorch stores (out_dim, in_dim) and does x @ W.T — same math).
    w = jax.random.uniform(kw, (in_dim, out_dim), dtype, -bound, bound)
    b = jax.random.uniform(kb, (1, out_dim), dtype, -bound, bound)
    return w, b


def init_geometry_decoder_params(key, input_feat_dim=16, W=128, D=4):
    # skips=[], n_freq=-1 -> input_ch == input_feat_dim
    params = []
    keys = jax.random.split(key, D + 1)
    for l in range(D + 1):
        in_dim = input_feat_dim if l == 0 else W
        out_dim = 1 if l == D else W
        params.append(init_linear(keys[l], in_dim, out_dim))
    return params


# ---------------------------------------------------------------------------
# Pallas kernel: whole geometry-decoder MLP for one tile of points.
# ---------------------------------------------------------------------------
def geometry_mlp_kernel(x_ref,
                        w0, b0, w1, b1, w2, b2, w3, b3, w4r, b4,
                        o_ref):
    # bf16 matmul operands, f32 accumulation (native MXU path on all gens).
    h = x_ref[...].astype(jnp.bfloat16)

    # Hidden layers 0..2: MXU matmul; bias + ReLU + bf16 recast fused into one
    # epilogue pass over the f32 accumulator (no f32 activation round-trip).
    for w, b in ((w0, b0), (w1, b1), (w2, b2)):
        acc = jnp.dot(h, w[...], preferred_element_type=jnp.float32)
        h = jnp.maximum(acc + b[...], 0.0).astype(jnp.bfloat16)

    # Hidden layer 3: keep the ReLU output in f32 — it feeds the f32 head.
    acc = jnp.dot(h, w3[...], preferred_element_type=jnp.float32)
    h32 = jnp.maximum(acc + b3[...], 0.0)

    # Final layer 128 -> 1 as a VPU multiply + lane reduction (a 1-column MXU
    # matmul would use only 1/128 of the array's columns), then sigmoid
    # (GeometryDecoder applies sigmoid because out_dim == 1).
    out = jnp.sum(h32 * w4r[...], axis=-1, keepdims=True) + b4[0, 0]
    o_ref[...] = jax.nn.sigmoid(out).astype(o_ref.dtype)


# ---------------------------------------------------------------------------
# Tile / VMEM-budget selection.
# ---------------------------------------------------------------------------
def _choose_tile(n, tile_n):
    """Row tile: multiple of 8 (256 when large), <= n, >=2 grid steps for big n."""
    if n <= 8:
        return n  # one block equal to the full row extent (allowed)
    tile = max(8, (min(int(tile_n), n) // 8) * 8)   # (8,128) sublane constraint
    if n >= 1024:
        # Guarantee >= 2 grid steps so v7x's two TensorCores both get work on
        # the 'parallel' row axis (no measurable effect on single-TC v5e/v6e).
        tile = min(tile, _round_up(-(-n // 2), 8))
    if tile >= 512:
        tile = (tile // 256) * 256                  # clean vmatmul row groups
    return tile


def _vmem_limit_bytes(tile, in_ch):
    """Scoped-VMEM budget for the chosen tile (lane-padded, with headroom)."""
    in_bytes = 2 * tile * _round_up(in_ch, 128) * 4   # feat tile, double-buffered
    out_bytes = 2 * tile * 128 * 4                    # (tile,1) lane-padded output
    act_bytes = 4 * tile * 128 * 4                    # f32 acc + bf16 activations
    fixed = 10 << 20                                  # weights + compiler slack
    return int(min(in_bytes + out_bytes + act_bytes + fixed, 64 << 20))


def nerf_decoder_forward(feat, params, *, tile_n=8192):
    """NeRFDecoder.forward(feat, view_dirs=None) -> [N, 1]."""
    # TODO(synk): the view_dirs branch of NeRFDecoder.forward calls
    # radiance_net(h, view_dirs=...) which is not a valid signature of
    # RadianceDecoder.forward in the reference module; only the
    # view_dirs=None path is implemented here.
    N, C = feat.shape
    (w0, b0), (w1, b1), (w2, b2), (w3, b3), (w4, b4) = params

    # Matmul weights in bf16 (operands); biases stay f32 (added post-accum).
    w0b = w0.astype(jnp.bfloat16)
    w1b = w1.astype(jnp.bfloat16)
    w2b = w2.astype(jnp.bfloat16)
    w3b = w3.astype(jnp.bfloat16)
    w4_row = jnp.reshape(w4.astype(jnp.float32), (1, w4.shape[0]))   # (1, 128)
    b4_s = jnp.reshape(b4.astype(jnp.float32), (1, 1))               # SMEM scalar

    tile = _choose_tile(N, tile_n)
    # No wrapper-side padding: ragged last block is handled by Pallas
    # (partial reads, masked writeback); rows are independent so stale rows
    # in the partial block never contaminate valid outputs.
    grid = (pl.cdiv(N, tile),)

    def resident(shape):
        # Whole-array block, same block index every grid step -> stays in VMEM.
        return pl.BlockSpec(shape, lambda i: tuple(0 for _ in shape))

    out = pl.pallas_call(
        geometry_mlp_kernel,
        out_shape=jax.ShapeDtypeStruct((N, 1), feat.dtype),
        grid_spec=pltpu.PrefetchScalarGridSpec(
            num_scalar_prefetch=0,
            grid=grid,
            in_specs=[
                pl.BlockSpec((tile, C), lambda i: (i, 0)),   # feat tile
                resident(w0b.shape), resident(b0.shape),
                resident(w1b.shape), resident(b1.shape),
                resident(w2b.shape), resident(b2.shape),
                resident(w3b.shape), resident(b3.shape),
                resident(w4_row.shape),
                # Final scalar bias lives in SMEM (scalar read in the kernel).
                pl.BlockSpec(memory_space=pltpu.MemorySpace.SMEM),
            ],
            out_specs=pl.BlockSpec((tile, 1), lambda i: (i, 0)),
        ),
        compiler_params=pltpu.CompilerParams(
            dimension_semantics=("parallel",),
            vmem_limit_bytes=_vmem_limit_bytes(tile, C),
        ),
    )(feat, w0b, b0, w1b, b1, w2b, b2, w3b, b3, w4_row, b4_s)
    return out


# ---------------------------------------------------------------------------
# Pure-JAX reference mirroring the kernel's bf16-operand / f32-accumulate path.
# ---------------------------------------------------------------------------
def reference_forward(feat, params):
    (w0, b0), (w1, b1), (w2, b2), (w3, b3), (w4, b4) = params
    h = feat.astype(jnp.float32)
    for w, b in ((w0, b0), (w1, b1), (w2, b2), (w3, b3)):
        h = jnp.dot(h.astype(jnp.bfloat16), w.astype(jnp.bfloat16),
                    preferred_element_type=jnp.float32) + b
        h = jnp.maximum(h, 0.0)
    out = h @ w4.astype(jnp.float32) + b4
    return jax.nn.sigmoid(out)[..., :1].astype(feat.dtype)


if __name__ == "__main__":
    key = jax.random.PRNGKey(0)
    k_feat, k_params = jax.random.split(key)

    occ_feat_dim = 16      # GeometryDecoder input_feat_dim
    W, D = 128, 4          # GeometryDecoder defaults
    N = 300                # deliberately NOT a tile multiple (ragged last block)

    feat = jax.random.normal(k_feat, (N, occ_feat_dim), dtype=jnp.float32)
    params = init_geometry_decoder_params(k_params, occ_feat_dim, W, D)

    # Small tile for the demo so the grid has 2 steps and the second block is
    # ragged (exercises the no-pad path); production use keeps the default
    # tile_n=8192 to amortize the ~0.35 us per-grid-step overhead.
    out = nerf_decoder_forward(feat, params, tile_n=256)
    out = jax.block_until_ready(out)

    ref = reference_forward(feat, params)
    assert out.shape == (N, 1)
    assert jnp.allclose(out, ref, atol=2e-2, rtol=2e-2), "mismatch vs reference"

    print("KERNEL_OK")
</pallas_src>

<mosaic_0001>
module attributes {stable_mosaic.version = 11 : i64} {
  func.func @geometry_mlp_kernel(%arg0: i32, %arg1: memref<256x16xf32, #tpu.memory_space<vmem>>, %arg2: memref<16x128xbf16, #tpu.memory_space<vmem>>, %arg3: memref<1x128xf32, #tpu.memory_space<vmem>>, %arg4: memref<128x128xbf16, #tpu.memory_space<vmem>>, %arg5: memref<1x128xf32, #tpu.memory_space<vmem>>, %arg6: memref<128x128xbf16, #tpu.memory_space<vmem>>, %arg7: memref<1x128xf32, #tpu.memory_space<vmem>>, %arg8: memref<128x128xbf16, #tpu.memory_space<vmem>>, %arg9: memref<1x128xf32, #tpu.memory_space<vmem>>, %arg10: memref<1x128xf32, #tpu.memory_space<vmem>>, %arg11: memref<1x1xf32, #tpu.memory_space<smem>>, %arg12: memref<256x1xf32, #tpu.memory_space<vmem>>) attributes {dimension_semantics = [#tpu.dimension_semantics<parallel>], iteration_bounds = array<i64: 2>, scalar_prefetch = 0 : i64, scratch_operands = 0 : i64, tpu.core_type = #tpu.core_type<tc>, window_params = [{transform_indices = @transform_0, window_bounds = array<i64: 256, 16>}, {pipeline_mode = #tpu.pipeline_mode<synchronous>, transform_indices = @transform_1, window_bounds = array<i64: 16, 128>}, {pipeline_mode = #tpu.pipeline_mode<synchronous>, transform_indices = @transform_2, window_bounds = array<i64: 1, 128>}, {pipeline_mode = #tpu.pipeline_mode<synchronous>, transform_indices = @transform_3, window_bounds = array<i64: 128, 128>}, {pipeline_mode = #tpu.pipeline_mode<synchronous>, transform_indices = @transform_4, window_bounds = array<i64: 1, 128>}, {pipeline_mode = #tpu.pipeline_mode<synchronous>, transform_indices = @transform_5, window_bounds = array<i64: 128, 128>}, {pipeline_mode = #tpu.pipeline_mode<synchronous>, transform_indices = @transform_6, window_bounds = array<i64: 1, 128>}, {pipeline_mode = #tpu.pipeline_mode<synchronous>, transform_indices = @transform_7, window_bounds = array<i64: 128, 128>}, {pipeline_mode = #tpu.pipeline_mode<synchronous>, transform_indices = @transform_8, window_bounds = array<i64: 1, 128>}, {pipeline_mode = #tpu.pipeline_mode<synchronous>, transform_indices = @transform_9, window_bounds = array<i64: 1, 128>}, {transform_indices = @transform_10, window_bounds = array<i64: 1, 1>}, {transform_indices = @transform_11, window_bounds = array<i64: 256, 1>}]} {
    %c0 = arith.constant 0 : index
    %c0_0 = arith.constant 0 : index
    %0 = vector.load %arg1[%c0, %c0_0] : memref<256x16xf32, #tpu.memory_space<vmem>>, vector<256x16xf32>
    %1 = arith.truncf %0 : vector<256x16xf32> to vector<256x16xbf16>
    %c0_1 = arith.constant 0 : index
    %c0_2 = arith.constant 0 : index
    %2 = vector.load %arg2[%c0_1, %c0_2] : memref<16x128xbf16, #tpu.memory_space<vmem>>, vector<16x128xbf16>
    %cst = arith.constant dense<0.000000e+00> : vector<256x128xf32>
    %3 = tpu.matmul %1, %2, %cst {dimension_numbers = #tpu.dot_dimension_numbers<[1], [0], [0], [1], [0, 0, 1, 1], [], []>} : vector<256x16xbf16>, vector<16x128xbf16>, vector<256x128xf32> -> vector<256x128xf32>
    %c0_3 = arith.constant 0 : index
    %c0_4 = arith.constant 0 : index
    %4 = vector.load %arg3[%c0_3, %c0_4] : memref<1x128xf32, #tpu.memory_space<vmem>>, vector<1x128xf32>
    %5 = vector.broadcast %4 : vector<1x128xf32> to vector<256x128xf32>
    %6 = arith.addf %3, %5 : vector<256x128xf32>
    %cst_5 = arith.constant 0.000000e+00 : f32
    %7 = vector.broadcast %cst_5 : f32 to vector<256x128xf32>
    %8 = arith.maximumf %6, %7 : vector<256x128xf32>
    %9 = arith.truncf %8 : vector<256x128xf32> to vector<256x128xbf16>
    %c0_6 = arith.constant 0 : index
    %c0_7 = arith.constant 0 : index
    %10 = vector.load %arg4[%c0_6, %c0_7] : memref<128x128xbf16, #tpu.memory_space<vmem>>, vector<128x128xbf16>
    %cst_8 = arith.constant dense<0.000000e+00> : vector<256x128xf32>
    %11 = tpu.matmul %9, %10, %cst_8 {dimension_numbers = #tpu.dot_dimension_numbers<[1], [0], [0], [1], [0, 0, 1, 1], [], []>} : vector<256x128xbf16>, vector<128x128xbf16>, vector<256x128xf32> -> vector<256x128xf32>
    %c0_9 = arith.constant 0 : index
    %c0_10 = arith.constant 0 : index
    %12 = vector.load %arg5[%c0_9, %c0_10] : memref<1x128xf32, #tpu.memory_space<vmem>>, vector<1x128xf32>
    %13 = vector.broadcast %12 : vector<1x128xf32> to vector<256x128xf32>
    %14 = arith.addf %11, %13 : vector<256x128xf32>
    %cst_11 = arith.constant 0.000000e+00 : f32
    %15 = vector.broadcast %cst_11 : f32 to vector<256x128xf32>
    %16 = arith.maximumf %14, %15 : vector<256x128xf32>
    %17 = arith.truncf %16 : vector<256x128xf32> to vector<256x128xbf16>
    %c0_12 = arith.constant 0 : index
    %c0_13 = arith.constant 0 : index
    %18 = vector.load %arg6[%c0_12, %c0_13] : memref<128x128xbf16, #tpu.memory_space<vmem>>, vector<128x128xbf16>
    %cst_14 = arith.constant dense<0.000000e+00> : vector<256x128xf32>
    %19 = tpu.matmul %17, %18, %cst_14 {dimension_numbers = #tpu.dot_dimension_numbers<[1], [0], [0], [1], [0, 0, 1, 1], [], []>} : vector<256x128xbf16>, vector<128x128xbf16>, vector<256x128xf32> -> vector<256x128xf32>
    %c0_15 = arith.constant 0 : index
    %c0_16 = arith.constant 0 : index
    %20 = vector.load %arg7[%c0_15, %c0_16] : memref<1x128xf32, #tpu.memory_space<vmem>>, vector<1x128xf32>
    %21 = vector.broadcast %20 : vector<1x128xf32> to vector<256x128xf32>
    %22 = arith.addf %19, %21 : vector<256x128xf32>
    %cst_17 = arith.constant 0.000000e+00 : f32
    %23 = vector.broadcast %cst_17 : f32 to vector<256x128xf32>
    %24 = arith.maximumf %22, %23 : vector<256x128xf32>
    %25 = arith.truncf %24 : vector<256x128xf32> to vector<256x128xbf16>
    %c0_18 = arith.constant 0 : index
    %c0_19 = arith.constant 0 : index
    %26 = vector.load %arg8[%c0_18, %c0_19] : memref<128x128xbf16, #tpu.memory_space<vmem>>, vector<128x128xbf16>
    %cst_20 = arith.constant dense<0.000000e+00> : vector<256x128xf32>
    %27 = tpu.matmul %25, %26, %cst_20 {dimension_numbers = #tpu.dot_dimension_numbers<[1], [0], [0], [1], [0, 0, 1, 1], [], []>} : vector<256x128xbf16>, vector<128x128xbf16>, vector<256x128xf32> -> vector<256x128xf32>
    %c0_21 = arith.constant 0 : index
    %c0_22 = arith.constant 0 : index
    %28 = vector.load %arg9[%c0_21, %c0_22] : memref<1x128xf32, #tpu.memory_space<vmem>>, vector<1x128xf32>
    %29 = vector.broadcast %28 : vector<1x128xf32> to vector<256x128xf32>
    %30 = arith.addf %27, %29 : vector<256x128xf32>
    %cst_23 = arith.constant 0.000000e+00 : f32
    %31 = vector.broadcast %cst_23 : f32 to vector<256x128xf32>
    %32 = arith.maximumf %30, %31 : vector<256x128xf32>
    %c0_24 = arith.constant 0 : index
    %c0_25 = arith.constant 0 : index
    %33 = vector.load %arg10[%c0_24, %c0_25] : memref<1x128xf32, #tpu.memory_space<vmem>>, vector<1x128xf32>
    %34 = vector.broadcast %33 : vector<1x128xf32> to vector<256x128xf32>
    %35 = arith.mulf %32, %34 : vector<256x128xf32>
    %cst_26 = arith.constant dense<0.000000e+00> : vector<256xf32>
    %36 = vector.multi_reduction <add>, %35, %cst_26 [1] : vector<256x128xf32> to vector<256xf32>
    %37 = vector.shape_cast %36 : vector<256xf32> to vector<256x1xf32>
    %c0_27 = arith.constant 0 : index
    %c0_28 = arith.constant 0 : index
    %38 = memref.load %arg11[%c0_27, %c0_28] : memref<1x1xf32, #tpu.memory_space<smem>>
    %39 = vector.broadcast %38 : f32 to vector<256x1xf32>
    %40 = arith.addf %37, %39 : vector<256x1xf32>
    %41 = arith.negf %40 : vector<256x1xf32>
    %42 = math.exp %41 : vector<256x1xf32>
    %cst_29 = arith.constant 1.000000e+00 : f32
    %43 = vector.broadcast %cst_29 : f32 to vector<256x1xf32>
    %44 = arith.addf %43, %42 : vector<256x1xf32>
    %45 = arith.divf %43, %44 : vector<256x1xf32>
    %c0_30 = arith.constant 0 : index
    %c0_31 = arith.constant 0 : index
    %46 = vector.load %arg12[%c0_30, %c0_31] : memref<256x1xf32, #tpu.memory_space<vmem>>, vector<256x1xf32>
    tpu.vector_store %arg12[%c0_30, %c0_31], %45 {strides = array<i32>} : memref<256x1xf32, #tpu.memory_space<vmem>>, vector<256x1xf32>,
    return
  }
  func.func @transform_0(%arg0: i32) -> (i32, i32) {
    %c0_i32 = arith.constant 0 : i32
    %c0_i32_0 = arith.constant 0 : i32
    return %arg0, %c0_i32 : i32, i32
  }
  func.func @transform_1(%arg0: i32) -> (i32, i32) {
    %c0_i32 = arith.constant 0 : i32
    %c0_i32_0 = arith.constant 0 : i32
    %c0_i32_1 = arith.constant 0 : i32
    return %c0_i32, %c0_i32_0 : i32, i32
  }
  func.func @transform_2(%arg0: i32) -> (i32, i32) {
    %c0_i32 = arith.constant 0 : i32
    %c0_i32_0 = arith.constant 0 : i32
    %c0_i32_1 = arith.constant 0 : i32
    return %c0_i32, %c0_i32_0 : i32, i32
  }
  func.func @transform_3(%arg0: i32) -> (i32, i32) {
    %c0_i32 = arith.constant 0 : i32
    %c0_i32_0 = arith.constant 0 : i32
    %c0_i32_1 = arith.constant 0 : i32
    return %c0_i32, %c0_i32_0 : i32, i32
  }
  func.func @transform_4(%arg0: i32) -> (i32, i32) {
    %c0_i32 = arith.constant 0 : i32
    %c0_i32_0 = arith.constant 0 : i32
    %c0_i32_1 = arith.constant 0 : i32
    return %c0_i32, %c0_i32_0 : i32, i32
  }
  func.func @transform_5(%arg0: i32) -> (i32, i32) {
    %c0_i32 = arith.constant 0 : i32
    %c0_i32_0 = arith.constant 0 : i32
    %c0_i32_1 = arith.constant 0 : i32
    return %c0_i32, %c0_i32_0 : i32, i32
  }
  func.func @transform_6(%arg0: i32) -> (i32, i32) {
    %c0_i32 = arith.constant 0 : i32
    %c0_i32_0 = arith.constant 0 : i32
    %c0_i32_1 = arith.constant 0 : i32
    return %c0_i32, %c0_i32_0 : i32, i32
  }
  func.func @transform_7(%arg0: i32) -> (i32, i32) {
    %c0_i32 = arith.constant 0 : i32
    %c0_i32_0 = arith.constant 0 : i32
    %c0_i32_1 = arith.constant 0 : i32
    return %c0_i32, %c0_i32_0 : i32, i32
  }
  func.func @transform_8(%arg0: i32) -> (i32, i32) {
    %c0_i32 = arith.constant 0 : i32
    %c0_i32_0 = arith.constant 0 : i32
    %c0_i32_1 = arith.constant 0 : i32
    return %c0_i32, %c0_i32_0 : i32, i32
  }
  func.func @transform_9(%arg0: i32) -> (i32, i32) {
    %c0_i32 = arith.constant 0 : i32
    %c0_i32_0 = arith.constant 0 : i32
    %c0_i32_1 = arith.constant 0 : i32
    return %c0_i32, %c0_i32_0 : i32, i32
  }
  func.func @transform_10(%arg0: i32) -> (i32, i32) {
    %c0_i32 = arith.constant 0 : i32
    %c0_i32_0 = arith.constant 0 : i32
    %c0_i32_1 = arith.constant 0 : i32
    return %c0_i32, %c0_i32_0 : i32, i32
  }
  func.func @transform_11(%arg0: i32) -> (i32, i32) {
    %c0_i32 = arith.constant 0 : i32
    %c0_i32_0 = arith.constant 0 : i32
    return %arg0, %c0_i32 : i32, i32
  }
}

</mosaic_0001>

<llo_original>
// kernel: tpu_custom_call.1
$region0: #{tpu_custom_call.1}
  #allocation0 [shape = 'u32[]', space=smem, size = 0x4, offset = 0x4, fixed_abs, tag = 'smem constant byte address 0x4 - core index']
  #allocation1 [shape = 'u32[144,128]{1,0:T(1,128)}', space=vmem, size = 0x12000, scoped, tag = 'internal scratch']
  #allocation2 [shape = 'f32[1,1]{1,0:T(1,128)S(6)}', space=smem, size = 0x200, scoped, tag = 'scoped memory for tpu_custom_call.1']
  %s0 = inlined_call_operand.vmem [shape: f32[300,16], index: 0, kind: input, shape index: {}]
  %s1 = inlined_call_operand.vmem [shape: bf16[16,128], index: 1, kind: input, shape index: {}]
  %s2 = inlined_call_operand.vmem [shape: f32[1,128], index: 2, kind: input, shape index: {}]
  %s3 = inlined_call_operand.vmem [shape: bf16[128,128], index: 3, kind: input, shape index: {}]
  %s4 = inlined_call_operand.vmem [shape: f32[1,128], index: 4, kind: input, shape index: {}]
  %s5 = inlined_call_operand.vmem [shape: bf16[128,128], index: 5, kind: input, shape index: {}]
  %s6 = inlined_call_operand.vmem [shape: f32[1,128], index: 6, kind: input, shape index: {}]
  %s7 = inlined_call_operand.vmem [shape: bf16[128,128], index: 7, kind: input, shape index: {}]
  %s8 = inlined_call_operand.vmem [shape: f32[1,128], index: 8, kind: input, shape index: {}]
  %s9 = inlined_call_operand.vmem [shape: f32[1,128], index: 9, kind: input, shape index: {}]
  %s10 = inlined_call_operand.<no memory space> [shape: f32[1,1], index: 10, kind: input, shape index: {}]
  %s11 = inlined_call_operand.vmem [shape: f32[300,1], index: 11, kind: output, shape index: {}]
  %s12 = sld [smem:[#allocation0]]
  $region125: #{tpu_custom_call.1} parent=0
    _
  %s14 = ssub.s32 1, %s12
  %s15 = scalar_select 0, %s14, %s12
  %16 = sst [smem:[#allocation2]] %s10
  $region1: #{tpu_custom_call.1} parent=0
    #allocation3 [shape = 'u8[262144]{0}', space=vmem, size = 0x40000, scoped, tag = 'output window, operand 0']
    loop: start=0, step=1, limit=4
    $region2: #{tpu_custom_call.1} parent=1 // loop_pre_header
      _
    $region3: #{tpu_custom_call.1} parent=1 // loop_header
      %s18 = sphi 0, %s22
      %p19 = scmp.ge.s32.totalorder %s18, 4
      %s28 = sphi 0, %s30
      %s31 = sphi 0, %s28
      %s32 = sphi 0, %s31
      %s48 = sphi 0, %s32
      %s52 = sphi 0, %s52
      %s54 = sphi 0, %s52
      %s55 = sphi 0, %s54
      %s69 = sphi 0, %s55
      %s73 = sphi 0, %s73
      %s75 = sphi 0, %s73
      %s76 = sphi 0, %s75
      %s90 = sphi 0, %s76
      %s94 = sphi 0, %s94
      %s96 = sphi 0, %s94
      %s97 = sphi 0, %s96
      %s111 = sphi 0, %s97
      %s115 = sphi 0, %s115
      %s117 = sphi 0, %s115
      %s118 = sphi 0, %s117
      %s132 = sphi 0, %s118
      %s136 = sphi 0, %s136
      %s138 = sphi 0, %s136
      %s139 = sphi 0, %s138
      %s153 = sphi 0, %s139
      %s157 = sphi 0, %s157
      %s159 = sphi 0, %s157
      %s160 = sphi 0, %s159
      %s174 = sphi 0, %s160
      %s178 = sphi 0, %s178
      %s180 = sphi 0, %s178
      %s181 = sphi 0, %s180
      %s195 = sphi 0, %s181
      %s199 = sphi 0, %s199
      %s201 = sphi 0, %s199
      %s202 = sphi 0, %s201
      %s216 = sphi 0, %s202
      %s220 = sphi 0, %s220
      %s222 = sphi 0, %s220
      %s223 = sphi 0, %s222
      %s237 = sphi 0, %s223
      %s241 = sphi 0, %s241
      %s243 = sphi 0, %s241
      %s244 = sphi 0, %s243
      %s258 = sphi 0, %s244
      %s264 = sphi 0, %s266
      %s267 = sphi 0, %s264
      %s268 = sphi 0, %s267
      %s284 = sphi 0, %s268
    $region4: #{tpu_custom_call.1} parent=1 // loop_header_branch
      %21 = sbr.rel (%p19) target = $region8
    $region5: #{tpu_custom_call.1} parent=1 // loop_body
      %s23 = ssub.s32 %s18, 1
      %s24 = ssub.s32 %s18, 2
      %s25 = sadd.s32 %s18, 1
      %s26 = ssub.s32 %s18, %s25
      %p27 = scmp.eq.s32.totalorder %s26, 0
      %s29 = sadd.s32 %s28, 1
      %s30 = scalar_select %p27, %s28, %s29
      %p33 = pneg %p27
      %p34 = scmp.eq.s32.totalorder %s18, 1
      %p35 = por %p33, %p34
      %p36 = scmp.ne.s32.totalorder %s28, %s31
      %p37 = scmp.eq.s32.totalorder %s18, 0
      %p38 = por %p36, %p37
      %p39 = scmp.ne.s32.totalorder %s28, %s31
      %p40 = scmp.eq.s32.totalorder %s23, 1
      %p41 = por %p39, %p40
      %p42 = scmp.ne.s32.totalorder %s31, %s32
      %p43 = scmp.eq.s32.totalorder %s23, 0
      %p44 = por %p42, %p43
      %p45 = scmp.ne.s32.totalorder %s31, %s32
      %p46 = scmp.eq.s32.totalorder %s24, 1
      %p47 = por %p45, %p46
      %p49 = scmp.ne.s32.totalorder %s32, %s48
      %p50 = scmp.eq.s32.totalorder %s24, 0
      %p51 = por %p49, %p50
      %s53 = sadd.s32 %s52, 1
      %p56 = scmp.eq.s32.totalorder %s18, 1
      %p57 = scmp.ne.s32.totalorder %s52, %s54
      %p58 = scmp.eq.s32.totalorder %s18, 0
      %p59 = por %p57, %p58
      %p60 = scmp.ne.s32.totalorder %s52, %s54
      %p61 = scmp.eq.s32.totalorder %s23, 1
      %p62 = por %p60, %p61
      %p63 = scmp.ne.s32.totalorder %s54, %s55
      %p64 = scmp.eq.s32.totalorder %s23, 0
      %p65 = por %p63, %p64
      %p66 = scmp.ne.s32.totalorder %s54, %s55
      %p67 = scmp.eq.s32.totalorder %s24, 1
      %p68 = por %p66, %p67
      %p70 = scmp.ne.s32.totalorder %s55, %s69
      %p71 = scmp.eq.s32.totalorder %s24, 0
      %p72 = por %p70, %p71
      %s74 = sadd.s32 %s73, 1
      %p77 = scmp.eq.s32.totalorder %s18, 1
      %p78 = scmp.ne.s32.totalorder %s73, %s75
      %p79 = scmp.eq.s32.totalorder %s18, 0
      %p80 = por %p78, %p79
      %p81 = scmp.ne.s32.totalorder %s73, %s75
      %p82 = scmp.eq.s32.totalorder %s23, 1
      %p83 = por %p81, %p82
      %p84 = scmp.ne.s32.totalorder %s75, %s76
      %p85 = scmp.eq.s32.totalorder %s23, 0
      %p86 = por %p84, %p85
      %p87 = scmp.ne.s32.totalorder %s75, %s76
      %p88 = scmp.eq.s32.totalorder %s24, 1
      %p89 = por %p87, %p88
      %p91 = scmp.ne.s32.totalorder %s76, %s90
      %p92 = scmp.eq.s32.totalorder %s24, 0
      %p93 = por %p91, %p92
      %s95 = sadd.s32 %s94, 1
      %p98 = scmp.eq.s32.totalorder %s18, 1
      %p99 = scmp.ne.s32.totalorder %s94, %s96
      %p100 = scmp.eq.s32.totalorder %s18, 0
      %p101 = por %p99, %p100
      %p102 = scmp.ne.s32.totalorder %s94, %s96
      %p103 = scmp.eq.s32.totalorder %s23, 1
      %p104 = por %p102, %p103
      %p105 = scmp.ne.s32.totalorder %s96, %s97
      %p106 = scmp.eq.s32.totalorder %s23, 0
      %p107 = por %p105, %p106
      %p108 = scmp.ne.s32.totalorder %s96, %s97
      %p109 = scmp.eq.s32.totalorder %s24, 1
      %p110 = por %p108, %p109
      %p112 = scmp.ne.s32.totalorder %s97, %s111
      %p113 = scmp.eq.s32.totalorder %s24, 0
      %p114 = por %p112, %p113
      %s116 = sadd.s32 %s115, 1
      %p119 = scmp.eq.s32.totalorder %s18, 1
      %p120 = scmp.ne.s32.totalorder %s115, %s117
      %p121 = scmp.eq.s32.totalorder %s18, 0
      %p122 = por %p120, %p121
      %p123 = scmp.ne.s32.totalorder %s115, %s117
      %p124 = scmp.eq.s32.totalorder %s23, 1
      %p125 = por %p123, %p124
      %p126 = scmp.ne.s32.totalorder %s117, %s118
      %p127 = scmp.eq.s32.totalorder %s23, 0
      %p128 = por %p126, %p127
      %p129 = scmp.ne.s32.totalorder %s117, %s118
      %p130 = scmp.eq.s32.totalorder %s24, 1
      %p131 = por %p129, %p130
      %p133 = scmp.ne.s32.totalorder %s118, %s132
      %p134 = scmp.eq.s32.totalorder %s24, 0
      %p135 = por %p133, %p134
      %s137 = sadd.s32 %s136, 1
      %p140 = scmp.eq.s32.totalorder %s18, 1
      %p141 = scmp.ne.s32.totalorder %s136, %s138
      %p142 = scmp.eq.s32.totalorder %s18, 0
      %p143 = por %p141, %p142
      %p144 = scmp.ne.s32.totalorder %s136, %s138
      %p145 = scmp.eq.s32.totalorder %s23, 1
      %p146 = por %p144, %p145
      %p147 = scmp.ne.s32.totalorder %s138, %s139
      %p148 = scmp.eq.s32.totalorder %s23, 0
      %p149 = por %p147, %p148
      %p150 = scmp.ne.s32.totalorder %s138, %s139
      %p151 = scmp.eq.s32.totalorder %s24, 1
      %p152 = por %p150, %p151
      %p154 = scmp.ne.s32.totalorder %s139, %s153
      %p155 = scmp.eq.s32.totalorder %s24, 0
      %p156 = por %p154, %p155
      %s158 = sadd.s32 %s157, 1
      %p161 = scmp.eq.s32.totalorder %s18, 1
      %p162 = scmp.ne.s32.totalorder %s157, %s159
      %p163 = scmp.eq.s32.totalorder %s18, 0
      %p164 = por %p162, %p163
      %p165 = scmp.ne.s32.totalorder %s157, %s159
      %p166 = scmp.eq.s32.totalorder %s23, 1
      %p167 = por %p165, %p166
      %p168 = scmp.ne.s32.totalorder %s159, %s160
      %p169 = scmp.eq.s32.totalorder %s23, 0
      %p170 = por %p168, %p169
      %p171 = scmp.ne.s32.totalorder %s159, %s160
      %p172 = scmp.eq.s32.totalorder %s24, 1
      %p173 = por %p171, %p172
      %p175 = scmp.ne.s32.totalorder %s160, %s174
      %p176 = scmp.eq.s32.totalorder %s24, 0
      %p177 = por %p175, %p176
      %s179 = sadd.s32 %s178, 1
      %p182 = scmp.eq.s32.totalorder %s18, 1
      %p183 = scmp.ne.s32.totalorder %s178, %s180
      %p184 = scmp.eq.s32.totalorder %s18, 0
      %p185 = por %p183, %p184
      %p186 = scmp.ne.s32.totalorder %s178, %s180
      %p187 = scmp.eq.s32.totalorder %s23, 1
      %p188 = por %p186, %p187
      %p189 = scmp.ne.s32.totalorder %s180, %s181
      %p190 = scmp.eq.s32.totalorder %s23, 0
      %p191 = por %p189, %p190
      %p192 = scmp.ne.s32.totalorder %s180, %s181
      %p193 = scmp.eq.s32.totalorder %s24, 1
      %p194 = por %p192, %p193
      %p196 = scmp.ne.s32.totalorder %s181, %s195
      %p197 = scmp.eq.s32.totalorder %s24, 0
      %p198 = por %p196, %p197
      %s200 = sadd.s32 %s199, 1
      %p203 = scmp.eq.s32.totalorder %s18, 1
      %p204 = scmp.ne.s32.totalorder %s199, %s201
      %p205 = scmp.eq.s32.totalorder %s18, 0
      %p206 = por %p204, %p205
      %p207 = scmp.ne.s32.totalorder %s199, %s201
      %p208 = scmp.eq.s32.totalorder %s23, 1
      %p209 = por %p207, %p208
      %p210 = scmp.ne.s32.totalorder %s201, %s202
      %p211 = scmp.eq.s32.totalorder %s23, 0
      %p212 = por %p210, %p211
      %p213 = scmp.ne.s32.totalorder %s201, %s202
      %p214 = scmp.eq.s32.totalorder %s24, 1
      %p215 = por %p213, %p214
      %p217 = scmp.ne.s32.totalorder %s202, %s216
      %p218 = scmp.eq.s32.totalorder %s24, 0
      %p219 = por %p217, %p218
      %s221 = sadd.s32 %s220, 1
      %p224 = scmp.eq.s32.totalorder %s18, 1
      %p225 = scmp.ne.s32.totalorder %s220, %s222
      %p226 = scmp.eq.s32.totalorder %s18, 0
      %p227 = por %p225, %p226
      %p228 = scmp.ne.s32.totalorder %s220, %s222
      %p229 = scmp.eq.s32.totalorder %s23, 1
      %p230 = por %p228, %p229
      %p231 = scmp.ne.s32.totalorder %s222, %s223
      %p232 = scmp.eq.s32.totalorder %s23, 0
      %p233 = por %p231, %p232
      %p234 = scmp.ne.s32.totalorder %s222, %s223
      %p235 = scmp.eq.s32.totalorder %s24, 1
      %p236 = por %p234, %p235
      %p238 = scmp.ne.s32.totalorder %s223, %s237
      %p239 = scmp.eq.s32.totalorder %s24, 0
      %p240 = por %p238, %p239
      %s242 = sadd.s32 %s241, 1
      %p245 = scmp.eq.s32.totalorder %s18, 1
      %p246 = scmp.ne.s32.totalorder %s241, %s243
      %p247 = scmp.eq.s32.totalorder %s18, 0
      %p248 = por %p246, %p247
      %p249 = scmp.ne.s32.totalorder %s241, %s243
      %p250 = scmp.eq.s32.totalorder %s23, 1
      %p251 = por %p249, %p250
      %p252 = scmp.ne.s32.totalorder %s243, %s244
      %p253 = scmp.eq.s32.totalorder %s23, 0
      %p254 = por %p252, %p253
      %p255 = scmp.ne.s32.totalorder %s243, %s244
      %p256 = scmp.eq.s32.totalorder %s24, 1
      %p257 = por %p255, %p256
      %p259 = scmp.ne.s32.totalorder %s244, %s258
      %p260 = scmp.eq.s32.totalorder %s24, 0
      %p261 = por %p259, %p260
      %s262 = ssub.s32 %s18, %s25
      %p263 = scmp.eq.s32.totalorder %s262, 0
      %s265 = sadd.s32 %s264, 1
      %s266 = scalar_select %p263, %s264, %s265
      %p269 = pneg %p263
      %p270 = scmp.eq.s32.totalorder %s18, 1
      %p271 = por %p269, %p270
      %p272 = scmp.ne.s32.totalorder %s264, %s267
      %p273 = scmp.eq.s32.totalorder %s18, 0
      %p274 = por %p272, %p273
      %p275 = scmp.ne.s32.totalorder %s264, %s267
      %p276 = scmp.eq.s32.totalorder %s23, 1
      %p277 = por %p275, %p276
      %p278 = scmp.ne.s32.totalorder %s267, %s268
      %p279 = scmp.eq.s32.totalorder %s23, 0
      %p280 = por %p278, %p279
      %p281 = scmp.ne.s32.totalorder %s267, %s268
      %p282 = scmp.eq.s32.totalorder %s24, 1
      %p283 = por %p281, %p282
      %p285 = scmp.ne.s32.totalorder %s268, %s284
      %p286 = scmp.eq.s32.totalorder %s24, 0
      %p287 = por %p285, %p286
      %p288 = scmp.le.s32.totalorder 1, %s18
      %p289 = scmp.lt.s32.totalorder %s18, 3
      %p290 = pnand %p288, %p289
      %p291 = pneg %p290
      // Predicated region
      $region9: #{tpu_custom_call.1} parent=5 // pred_check
        _
      $region10: #{tpu_custom_call.1} parent=5 // pred_check_branch
        %293 = sbr.rel (%p290) target = $region12
      $region11: #{tpu_custom_call.1} parent=5 // pred_region
        %s294 = ssub.s32 %s18, 1
        // Predicated region
        $region13: #{tpu_custom_call.1} parent=11 // pred_check
          %p295 = pneg %p65
        $region14: #{tpu_custom_call.1} parent=11 // pred_check_branch
          %297 = sbr.rel (%p295) target = $region16
        $region15: #{tpu_custom_call.1} parent=11 // pred_region
          _
        $region16: #{tpu_custom_call.1} parent=11 // pred_fallthru
          _
        // Predicated region
        $region17: #{tpu_custom_call.1} parent=11 // pred_check
          %p298 = pneg %p86
        $region18: #{tpu_custom_call.1} parent=11 // pred_check_branch
          %300 = sbr.rel (%p298) target = $region20
        $region19: #{tpu_custom_call.1} parent=11 // pred_region
          _
        $region20: #{tpu_custom_call.1} parent=11 // pred_fallthru
          _
        // Predicated region
        $region21: #{tpu_custom_call.1} parent=11 // pred_check
          %p301 = pneg %p107
        $region22: #{tpu_custom_call.1} parent=11 // pred_check_branch
          %303 = sbr.rel (%p301) target = $region24
        $region23: #{tpu_custom_call.1} parent=11 // pred_region
          _
        $region24: #{tpu_custom_call.1} parent=11 // pred_fallthru
          _
        // Predicated region
        $region25: #{tpu_custom_call.1} parent=11 // pred_check
          %p304 = pneg %p128
        $region26: #{tpu_custom_call.1} parent=11 // pred_check_branch
          %306 = sbr.rel (%p304) target = $region28
        $region27: #{tpu_custom_call.1} parent=11 // pred_region
          _
        $region28: #{tpu_custom_call.1} parent=11 // pred_fallthru
          _
        // Predicated region
        $region29: #{tpu_custom_call.1} parent=11 // pred_check
          %p307 = pneg %p149
        $region30: #{tpu_custom_call.1} parent=11 // pred_check_branch
          %309 = sbr.rel (%p307) target = $region32
        $region31: #{tpu_custom_call.1} parent=11 // pred_region
          _
        $region32: #{tpu_custom_call.1} parent=11 // pred_fallthru
          _
        // Predicated region
        $region33: #{tpu_custom_call.1} parent=11 // pred_check
          %p310 = pneg %p170
        $region34: #{tpu_custom_call.1} parent=11 // pred_check_branch
          %312 = sbr.rel (%p310) target = $region36
        $region35: #{tpu_custom_call.1} parent=11 // pred_region
          _
        $region36: #{tpu_custom_call.1} parent=11 // pred_fallthru
          _
        // Predicated region
        $region37: #{tpu_custom_call.1} parent=11 // pred_check
          %p313 = pneg %p191
        $region38: #{tpu_custom_call.1} parent=11 // pred_check_branch
          %315 = sbr.rel (%p313) target = $region40
        $region39: #{tpu_custom_call.1} parent=11 // pred_region
          _
        $region40: #{tpu_custom_call.1} parent=11 // pred_fallthru
          _
        // Predicated region
        $region41: #{tpu_custom_call.1} parent=11 // pred_check
          %p316 = pneg %p212
        $region42: #{tpu_custom_call.1} parent=11 // pred_check_branch
          %318 = sbr.rel (%p316) target = $region44
        $region43: #{tpu_custom_call.1} parent=11 // pred_region
          _
        $region44: #{tpu_custom_call.1} parent=11 // pred_fallthru
          _
        // Predicated region
        $region45: #{tpu_custom_call.1} parent=11 // pred_check
          %p319 = pneg %p233
        $region46: #{tpu_custom_call.1} parent=11 // pred_check_branch
          %321 = sbr.rel (%p319) target = $region48
        $region47: #{tpu_custom_call.1} parent=11 // pred_region
          _
        $region48: #{tpu_custom_call.1} parent=11 // pred_fallthru
          _
        // Predicated region
        $region49: #{tpu_custom_call.1} parent=11 // pred_check
          %p322 = pneg %p254
        $region50: #{tpu_custom_call.1} parent=11 // pred_check_branch
          %324 = sbr.rel (%p322) target = $region52
        $region51: #{tpu_custom_call.1} parent=11 // pred_region
          _
        $region52: #{tpu_custom_call.1} parent=11 // pred_fallthru
          _
      $region12: #{tpu_custom_call.1} parent=5 // pred_fallthru
        _
      %p325 = scmp.lt.s32.totalorder %s18, 2
      // Predicated region
      $region53: #{tpu_custom_call.1} parent=5 // pred_check
        %p326 = pneg %p325
      $region54: #{tpu_custom_call.1} parent=5 // pred_check_branch
        %328 = sbr.rel (%p326) target = $region56
      $region55: #{tpu_custom_call.1} parent=5 // pred_region
        // Predicated region
        $region57: #{tpu_custom_call.1} parent=55 // pred_check
          %p329 = pneg %p38
        $region58: #{tpu_custom_call.1} parent=55 // pred_check_branch
          %331 = sbr.rel (%p329) target = $region60
        $region59: #{tpu_custom_call.1} parent=55 // pred_region
          %s332 = smul.u32 32, %s18
          %s333 = ssub.s32 38, %s332
          %p334 = scmp.lt.s32.totalorder %s333, 32
          %s335 = scalar_select %p334, %s333, 32
          %s336 = smul.u32 128, %s335
          %p337 = scmp.lt.s32.totalorder %s332, 37
          %s338 = scalar_select %p337, %s332, 37
          %s339 = smul.addr %s338, 8
          %s340 = scalar_lea.vmem %s0, %s339
          %s341 = smul.u32 32, %s18
          %s342 = ssub.s32 38, %s341
          %p343 = scmp.lt.s32.totalorder %s342, 32
          %s344 = scalar_select %p343, %s342, 32
          %s345 = smul.u32 128, %s344
        $region60: #{tpu_custom_call.1} parent=55 // pred_fallthru
          _
      $region56: #{tpu_custom_call.1} parent=5 // pred_fallthru
        _
      %p346 = scmp.le.s32.totalorder 1, %s18
      %p347 = scmp.lt.s32.totalorder %s18, 3
      %p348 = pnand %p346, %p347
      %p349 = pneg %p348
      // Predicated region
      $region61: #{tpu_custom_call.1} parent=5 // pred_check
        _
      $region62: #{tpu_custom_call.1} parent=5 // pred_check_branch
        %351 = sbr.rel (%p348) target = $region64
      $region63: #{tpu_custom_call.1} parent=5 // pred_region
        %s352 = ssub.s32 %s18, 1
        %s353 = smul.u32 32, %s23
        %s354 = ssub.s32 38, %s353
        %p355 = scmp.lt.s32.totalorder %s354, 32
        %s356 = scalar_select %p355, %s354, 32
        %s357 = smul.u32 128, %s356
        %p358 = scmp.lt.s32.totalorder %s353, 37
        %s359 = scalar_select %p358, %s353, 37
        %s360 = smul.addr %s359, 8
        %s361 = scalar_lea.vmem %s0, %s360
        %p362 = pneg %p44
        %p363 = pneg %p41
        %p364 = pneg %p65
        %p365 = pneg %p62
        %p366 = pneg %p86
        %p367 = pneg %p83
        %p368 = pneg %p107
        %p369 = pneg %p104
        %p370 = pneg %p128
        %p371 = pneg %p125
        %p372 = pneg %p149
        %p373 = pneg %p146
        %p374 = pneg %p170
        %p375 = pneg %p167
        %p376 = pneg %p191
        %p377 = pneg %p188
        %p378 = pneg %p212
        %p379 = pneg %p209
        %p380 = pneg %p233
        %p381 = pneg %p230
        %p382 = pneg %p254
        %p383 = pneg %p251
        %p384 = pneg %p280
        %p385 = pneg %p277
        %s386 = sand.u32 %s267, 1
        %s387 = sand.u32 %s267, 1
        %s388 = smul.addr %s387, 256
        %s389 = scalar_lea.vmem [#allocation3], %s388
        %s390 = smul.u32 32, %s23
        %s391 = ssub.s32 38, %s390
        %p392 = scmp.lt.s32.totalorder %s391, 32
        %s393 = scalar_select %p392, %s391, 32
        %s394 = smul.u32 128, %s393
        %p395 = scmp.lt.s32.totalorder %s390, 37
        %s396 = scalar_select %p395, %s390, 37
        %s397 = smul.addr %s396, 8
        %s398 = scalar_lea.vmem %s0, %s397
        %s399 = smul.u32 32, %s23
        %s400 = ssub.s32 38, %s399
        %p401 = scmp.lt.s32.totalorder %s400, 32
        %s402 = scalar_select %p401, %s400, 32
        %s403 = smul.u32 128, %s402
        %s404 = smul.u32 32, %s23
        %s405 = ssub.s32 38, %s404
        %p406 = scmp.lt.s32.totalorder %s405, 32
        %s407 = scalar_select %p406, %s405, 32
        %s408 = smul.u32 128, %s407
        %v410 = vld [vmem:[%s398] sm:$0xff]
        %v411 = vld [vmem:[%s398 + $0x8] sm:$0xff]
        %v412 = vld [vmem:[%s398 + $0x10] sm:$0xff]
        %v413 = vld [vmem:[%s398 + $0x18] sm:$0xff]
        %v414 = vld [vmem:[%s398 + $0x20] sm:$0xff]
        %v415 = vld [vmem:[%s398 + $0x28] sm:$0xff]
        %v416 = vld [vmem:[%s398 + $0x30] sm:$0xff]
        %v417 = vld [vmem:[%s398 + $0x38] sm:$0xff]
        %v418 = vld [vmem:[%s398 + $0x40] sm:$0xff]
        %v419 = vld [vmem:[%s398 + $0x48] sm:$0xff]
        %v420 = vld [vmem:[%s398 + $0x50] sm:$0xff]
        %v421 = vld [vmem:[%s398 + $0x58] sm:$0xff]
        %v422 = vld [vmem:[%s398 + $0x60] sm:$0xff]
        %v423 = vld [vmem:[%s398 + $0x68] sm:$0xff]
        %v424 = vld [vmem:[%s398 + $0x70] sm:$0xff]
        %v425 = vld [vmem:[%s398 + $0x78] sm:$0xff]
        %v426 = vld [vmem:[%s398 + $0x80] sm:$0xff]
        %v427 = vld [vmem:[%s398 + $0x88] sm:$0xff]
        %v428 = vld [vmem:[%s398 + $0x90] sm:$0xff]
        %v429 = vld [vmem:[%s398 + $0x98] sm:$0xff]
        %v430 = vld [vmem:[%s398 + $0xa0] sm:$0xff]
        %v431 = vld [vmem:[%s398 + $0xa8] sm:$0xff]
        %v432 = vld [vmem:[%s398 + $0xb0] sm:$0xff]
        %v433 = vld [vmem:[%s398 + $0xb8] sm:$0xff]
        %v434 = vld [vmem:[%s398 + $0xc0] sm:$0xff]
        %v435 = vld [vmem:[%s398 + $0xc8] sm:$0xff]
        %v436 = vld [vmem:[%s398 + $0xd0] sm:$0xff]
        %v437 = vld [vmem:[%s398 + $0xd8] sm:$0xff]
        %v438 = vld [vmem:[%s398 + $0xe0] sm:$0xff]
        %v439 = vld [vmem:[%s398 + $0xe8] sm:$0xff]
        %v440 = vld [vmem:[%s398 + $0xf0] sm:$0xff]
        %v441 = vld [vmem:[%s398 + $0xf8] sm:$0xff]
        %v442 = vpack.c.bf16 %v411, %v410
        %v443 = vpack.c.bf16 %v413, %v412
        %v444 = vpack.c.bf16 %v415, %v414
        %v445 = vpack.c.bf16 %v417, %v416
        %v446 = vpack.c.bf16 %v419, %v418
        %v447 = vpack.c.bf16 %v421, %v420
        %v448 = vpack.c.bf16 %v423, %v422
        %v449 = vpack.c.bf16 %v425, %v424
        %v450 = vpack.c.bf16 %v427, %v426
        %v451 = vpack.c.bf16 %v429, %v428
        %v452 = vpack.c.bf16 %v431, %v430
        %v453 = vpack.c.bf16 %v433, %v432
        %v454 = vpack.c.bf16 %v435, %v434
        %v455 = vpack.c.bf16 %v437, %v436
        %v456 = vpack.c.bf16 %v439, %v438
        %v457 = vpack.c.bf16 %v441, %v440
        %v458 = vld [vmem:[%s1] sm:$0xf]
        %v459 = vld [vmem:[%s1 + $0x4] sm:$0xf]
        %v460 = vld [vmem:[%s2] sm:$0x1]
        %v462 = vlaneseq
        %v463 = vshrl.u32 %v462, 7
        %v464 = vsub.s32 0, %v463
        %v465 = vrot.slane %v460, %v464
        %v469 = vunpack.c.l.b16 %v458
        %v470 = vunpack.c.l.b16 %v459
        %v471 = vpack.c.b16 %v470, %v469
        %vm473 = vcmask 130048
        %v475 = vsel %vm473, %v442, 0
        %v478 = vsel %vm473, %v443, 0
        %v481 = vsel %vm473, %v444, 0
        %v484 = vsel %vm473, %v445, 0
        %v487 = vsel %vm473, %v446, 0
        %v490 = vsel %vm473, %v447, 0
        %v493 = vsel %vm473, %v448, 0
        %v496 = vsel %vm473, %v449, 0
        %v499 = vsel %vm473, %v450, 0
        %v502 = vsel %vm473, %v451, 0
        %v505 = vsel %vm473, %v452, 0
        %v508 = vsel %vm473, %v453, 0
        %v511 = vsel %vm473, %v454, 0
        %v514 = vsel %vm473, %v455, 0
        %v517 = vsel %vm473, %v456, 0
        %v520 = vsel %vm473, %v457, 0
        %522 = vmatprep.subr.bf16.mxu0 0
        %523 = vmatpush1.bf16.msra.mxu0 %v471
        %524 = vmatprep.subr.bf16.mxu0 0
        %525 = vmatpush1.bf16.msra.mxu0 0
        %526 = vmatprep.subr.bf16.mxu0 0
        %527 = vmatpush1.bf16.msra.mxu0 0
        %528 = vmatprep.subr.bf16.mxu0 0
        %529 = vmatpush1.bf16.msra.mxu0 0
        %530 = vmatprep.subr.bf16.mxu0 0
        %531 = vmatpush1.bf16.msra.mxu0 0
        %532 = vmatprep.subr.bf16.mxu0 0
        %533 = vmatpush1.bf16.msra.mxu0 0
        %534 = vmatprep.subr.bf16.mxu0 0
        %535 = vmatpush1.bf16.msra.mxu0 0
        %536 = vmatprep.subr.bf16.mxu0 0
        %537 = vmatpush1.bf16.msra.mxu0 0
        %538 = vmatprep.subr.bf16.mxu0 0
        %539 = vmatpush1.bf16.msra.mxu0 0
        %540 = vmatprep.subr.bf16.mxu0 0
        %541 = vmatpush1.bf16.msra.mxu0 0
        %542 = vmatprep.subr.bf16.mxu0 0
        %543 = vmatpush1.bf16.msra.mxu0 0
        %544 = vmatprep.subr.bf16.mxu0 0
        %545 = vmatpush1.bf16.msra.mxu0 0
        %546 = vmatprep.subr.bf16.mxu0 0
        %547 = vmatpush1.bf16.msra.mxu0 0
        %548 = vmatprep.subr.bf16.mxu0 0
        %549 = vmatpush1.bf16.msra.mxu0 0
        %550 = vmatprep.subr.bf16.mxu0 0
        %551 = vmatpush1.bf16.msra.mxu0 0
        %552 = vmatprep.subr.bf16.mxu0 0
        %553 = vmatpush1.bf16.msra.mxu0 0
        %554 = vmatprep.mubr.bf16.mxu0 0
        %555 = vmatmul.mubr.bf16.gmra.mrb[0].mxu0 %v475
        %v556 = vpop.f32.mrb[0].mxu0
        %v557 = vadd.f32 %v465, %v556
        %v558 = vpop.f32.mrb[0].mxu0
        %v559 = vpop.f32.mrb[0].mxu0
        %v560 = vadd.f32 %v465, %v559
        %v561 = vpop.f32.mrb[0].mxu0
        %562 = vmatprep.mubr.bf16.mxu0 0
        %563 = vmatmul.mubr.bf16.gmra.mrb[0].mxu0 %v478
        %v564 = vpop.f32.mrb[0].mxu0
        %v565 = vadd.f32 %v465, %v564
        %v566 = vpop.f32.mrb[0].mxu0
        %v567 = vpop.f32.mrb[0].mxu0
        %v568 = vadd.f32 %v465, %v567
        %v569 = vpop.f32.mrb[0].mxu0
        %570 = vmatprep.mubr.bf16.mxu0 0
        %571 = vmatmul.mubr.bf16.gmra.mrb[0].mxu0 %v481
        %v572 = vpop.f32.mrb[0].mxu0
        %v573 = vadd.f32 %v465, %v572
        %v574 = vpop.f32.mrb[0].mxu0
        %v575 = vpop.f32.mrb[0].mxu0
        %v576 = vadd.f32 %v465, %v575
        %v577 = vpop.f32.mrb[0].mxu0
        %578 = vmatprep.mubr.bf16.mxu0 0
        %579 = vmatmul.mubr.bf16.gmra.mrb[0].mxu0 %v484
        %v580 = vpop.f32.mrb[0].mxu0
        %v581 = vadd.f32 %v465, %v580
        %v582 = vpop.f32.mrb[0].mxu0
        %v583 = vpop.f32.mrb[0].mxu0
        %v584 = vadd.f32 %v465, %v583
        %v585 = vpop.f32.mrb[0].mxu0
        %586 = vmatprep.mubr.bf16.mxu0 0
        %587 = vmatmul.mubr.bf16.gmra.mrb[0].mxu0 %v487
        %v588 = vpop.f32.mrb[0].mxu0
        %v589 = vadd.f32 %v465, %v588
        %v590 = vpop.f32.mrb[0].mxu0
        %v591 = vpop.f32.mrb[0].mxu0
        %v592 = vadd.f32 %v465, %v591
        %v593 = vpop.f32.mrb[0].mxu0
        %594 = vmatprep.mubr.bf16.mxu0 0
        %595 = vmatmul.mubr.bf16.gmra.mrb[0].mxu0 %v490
        %v596 = vpop.f32.mrb[0].mxu0
        %v597 = vadd.f32 %v465, %v596
        %v598 = vpop.f32.mrb[0].mxu0
        %v599 = vpop.f32.mrb[0].mxu0
        %v600 = vadd.f32 %v465, %v599
        %v601 = vpop.f32.mrb[0].mxu0
        %602 = vmatprep.mubr.bf16.mxu0 0
        %603 = vmatmul.mubr.bf16.gmra.mrb[0].mxu0 %v493
        %v604 = vpop.f32.mrb[0].mxu0
        %v605 = vadd.f32 %v465, %v604
        %v606 = vpop.f32.mrb[0].mxu0
        %v607 = vpop.f32.mrb[0].mxu0
        %v608 = vadd.f32 %v465, %v607
        %v609 = vpop.f32.mrb[0].mxu0
        %610 = vmatprep.mubr.bf16.mxu0 0
        %611 = vmatmul.mubr.bf16.gmra.mrb[0].mxu0 %v496
        %v612 = vpop.f32.mrb[0].mxu0
        %v613 = vadd.f32 %v465, %v612
        %v614 = vpop.f32.mrb[0].mxu0
        %v615 = vpop.f32.mrb[0].mxu0
        %v616 = vadd.f32 %v465, %v615
        %v617 = vpop.f32.mrb[0].mxu0
        %618 = vmatprep.mubr.bf16.mxu0 0
        %619 = vmatmul.mubr.bf16.gmra.mrb[0].mxu0 %v499
        %v620 = vpop.f32.mrb[0].mxu0
        %v621 = vadd.f32 %v465, %v620
        %v622 = vpop.f32.mrb[0].mxu0
        %v623 = vpop.f32.mrb[0].mxu0
        %v624 = vadd.f32 %v465, %v623
        %v625 = vpop.f32.mrb[0].mxu0
        %626 = vmatprep.mubr.bf16.mxu0 0
        %627 = vmatmul.mubr.bf16.gmra.mrb[0].mxu0 %v502
        %v628 = vpop.f32.mrb[0].mxu0
        %v629 = vadd.f32 %v465, %v628
        %v630 = vpop.f32.mrb[0].mxu0
        %v631 = vpop.f32.mrb[0].mxu0
        %v632 = vadd.f32 %v465, %v631
        %v633 = vpop.f32.mrb[0].mxu0
        %634 = vmatprep.mubr.bf16.mxu0 0
        %635 = vmatmul.mubr.bf16.gmra.mrb[0].mxu0 %v505
        %v636 = vpop.f32.mrb[0].mxu0
        %v637 = vadd.f32 %v465, %v636
        %v638 = vpop.f32.mrb[0].mxu0
        %v639 = vpop.f32.mrb[0].mxu0
        %v640 = vadd.f32 %v465, %v639
        %v641 = vpop.f32.mrb[0].mxu0
        %642 = vmatprep.mubr.bf16.mxu0 0
        %643 = vmatmul.mubr.bf16.gmra.mrb[0].mxu0 %v508
        %v644 = vpop.f32.mrb[0].mxu0
        %v645 = vadd.f32 %v465, %v644
        %v646 = vpop.f32.mrb[0].mxu0
        %v647 = vpop.f32.mrb[0].mxu0
        %v648 = vadd.f32 %v465, %v647
        %v649 = vpop.f32.mrb[0].mxu0
        %650 = vmatprep.mubr.bf16.mxu0 0
        %651 = vmatmul.mubr.bf16.gmra.mrb[0].mxu0 %v511
        %v652 = vpop.f32.mrb[0].mxu0
        %v653 = vadd.f32 %v465, %v652
        %v654 = vpop.f32.mrb[0].mxu0
        %v655 = vpop.f32.mrb[0].mxu0
        %v656 = vadd.f32 %v465, %v655
        %v657 = vpop.f32.mrb[0].mxu0
        %658 = vmatprep.mubr.bf16.mxu0 0
        %659 = vmatmul.mubr.bf16.gmra.mrb[0].mxu0 %v514
        %v660 = vpop.f32.mrb[0].mxu0
        %v661 = vadd.f32 %v465, %v660
        %v662 = vpop.f32.mrb[0].mxu0
        %v663 = vpop.f32.mrb[0].mxu0
        %v664 = vadd.f32 %v465, %v663
        %v665 = vpop.f32.mrb[0].mxu0
        %666 = vmatprep.mubr.bf16.mxu0 0
        %667 = vmatmul.mubr.bf16.gmra.mrb[0].mxu0 %v517
        %v668 = vpop.f32.mrb[0].mxu0
        %v669 = vadd.f32 %v465, %v668
        %v670 = vpop.f32.mrb[0].mxu0
        %v671 = vpop.f32.mrb[0].mxu0
        %v672 = vadd.f32 %v465, %v671
        %v673 = vpop.f32.mrb[0].mxu0
        %674 = vmatprep.mubr.bf16.mxu0 0
        %675 = vmatmul.mubr.bf16.gmra.mrb[0].mxu0 %v520
        %v676 = vpop.f32.mrb[0].mxu0
        %v677 = vadd.f32 %v465, %v676
        %v678 = vpop.f32.mrb[0].mxu0
        %v679 = vpop.f32.mrb[0].mxu0
        %v680 = vadd.f32 %v465, %v679
        %v681 = vpop.f32.mrb[0].mxu0
        %682 = vdwg.mxu0
        %v683 = vmax.f32 %v557, 0.0
        %v684 = vmax.f32 %v560, 0.0
        %v685 = vmax.f32 %v565, 0.0
        %v686 = vmax.f32 %v568, 0.0
        %v687 = vmax.f32 %v573, 0.0
        %v688 = vmax.f32 %v576, 0.0
        %v689 = vmax.f32 %v581, 0.0
        %v690 = vmax.f32 %v584, 0.0
        %v691 = vmax.f32 %v589, 0.0
        %v692 = vmax.f32 %v592, 0.0
        %v693 = vmax.f32 %v597, 0.0
        %v694 = vmax.f32 %v600, 0.0
        %v695 = vmax.f32 %v605, 0.0
        %v696 = vmax.f32 %v608, 0.0
        %v697 = vmax.f32 %v613, 0.0
        %v698 = vmax.f32 %v616, 0.0
        %v699 = vmax.f32 %v621, 0.0
        %v700 = vmax.f32 %v624, 0.0
        %v701 = vmax.f32 %v629, 0.0
        %v702 = vmax.f32 %v632, 0.0
        %v703 = vmax.f32 %v637, 0.0
        %v704 = vmax.f32 %v640, 0.0
        %v705 = vmax.f32 %v645, 0.0
        %v706 = vmax.f32 %v648, 0.0
        %v707 = vmax.f32 %v653, 0.0
        %v708 = vmax.f32 %v656, 0.0
        %v709 = vmax.f32 %v661, 0.0
        %v710 = vmax.f32 %v664, 0.0
        %v711 = vmax.f32 %v669, 0.0
        %v712 = vmax.f32 %v672, 0.0
        %v713 = vmax.f32 %v677, 0.0
        %v714 = vmax.f32 %v680, 0.0
        %v715 = vpack.c.bf16 %v684, %v683
        %v716 = vpack.c.bf16 %v686, %v685
        %v717 = vpack.c.bf16 %v688, %v687
        %v718 = vpack.c.bf16 %v690, %v689
        %v719 = vpack.c.bf16 %v692, %v691
        %v720 = vpack.c.bf16 %v694, %v693
        %v721 = vpack.c.bf16 %v696, %v695
        %v722 = vpack.c.bf16 %v698, %v697
        %v723 = vpack.c.bf16 %v700, %v699
        %v724 = vpack.c.bf16 %v702, %v701
        %v725 = vpack.c.bf16 %v704, %v703
        %v726 = vpack.c.bf16 %v706, %v705
        %v727 = vpack.c.bf16 %v708, %v707
        %v728 = vpack.c.bf16 %v710, %v709
        %v729 = vpack.c.bf16 %v712, %v711
        %v730 = vpack.c.bf16 %v714, %v713
        %v731 = vld [vmem:[%s3] sm:$0xf]
        %v732 = vld [vmem:[%s3 + $0x4] sm:$0xf]
        %v733 = vld [vmem:[%s3 + $0x8] sm:$0xf]
        %v734 = vld [vmem:[%s3 + $0xc] sm:$0xf]
        %v735 = vld [vmem:[%s3 + $0x10] sm:$0xf]
        %v736 = vld [vmem:[%s3 + $0x14] sm:$0xf]
        %v737 = vld [vmem:[%s3 + $0x18] sm:$0xf]
        %v738 = vld [vmem:[%s3 + $0x1c] sm:$0xf]
        %v739 = vld [vmem:[%s3 + $0x20] sm:$0xf]
        %v740 = vld [vmem:[%s3 + $0x24] sm:$0xf]
        %v741 = vld [vmem:[%s3 + $0x28] sm:$0xf]
        %v742 = vld [vmem:[%s3 + $0x2c] sm:$0xf]
        %v743 = vld [vmem:[%s3 + $0x30] sm:$0xf]
        %v744 = vld [vmem:[%s3 + $0x34] sm:$0xf]
        %v745 = vld [vmem:[%s3 + $0x38] sm:$0xf]
        %v746 = vld [vmem:[%s3 + $0x3c] sm:$0xf]
        %v747 = vld [vmem:[%s4] sm:$0x1]
        %v749 = vlaneseq
        %v750 = vshrl.u32 %v749, 7
        %v751 = vsub.s32 0, %v750
        %v752 = vrot.slane %v747, %v751
        %v770 = vunpack.c.l.b16 %v731
        %v771 = vunpack.c.l.b16 %v732
        %v772 = vunpack.c.l.b16 %v733
        %v773 = vunpack.c.l.b16 %v734
        %v774 = vunpack.c.l.b16 %v735
        %v775 = vunpack.c.l.b16 %v736
        %v776 = vunpack.c.l.b16 %v737
        %v777 = vunpack.c.l.b16 %v738
        %v778 = vunpack.c.l.b16 %v739
        %v779 = vunpack.c.l.b16 %v740
        %v780 = vunpack.c.l.b16 %v741
        %v781 = vunpack.c.l.b16 %v742
        %v782 = vunpack.c.l.b16 %v743
        %v783 = vunpack.c.l.b16 %v744
        %v784 = vunpack.c.l.b16 %v745
        %v785 = vunpack.c.l.b16 %v746
        %v786 = vpack.c.b16 %v771, %v770
        %v787 = vpack.c.b16 %v773, %v772
        %v788 = vpack.c.b16 %v775, %v774
        %v789 = vpack.c.b16 %v777, %v776
        %v790 = vpack.c.b16 %v779, %v778
        %v791 = vpack.c.b16 %v781, %v780
        %v792 = vpack.c.b16 %v783, %v782
        %v793 = vpack.c.b16 %v785, %v784
        %802 = vmatprep.subr.bf16.mxu0 0
        %803 = vmatpush1.bf16.msra.mxu0 %v786
        %804 = vmatprep.subr.bf16.mxu0 0
        %805 = vmatpush1.bf16.msra.mxu0 %v787
        %806 = vmatprep.subr.bf16.mxu0 0
        %807 = vmatpush1.bf16.msra.mxu0 %v788
        %808 = vmatprep.subr.bf16.mxu0 0
        %809 = vmatpush1.bf16.msra.mxu0 %v789
        %810 = vmatprep.subr.bf16.mxu0 0
        %811 = vmatpush1.bf16.msra.mxu0 %v790
        %812 = vmatprep.subr.bf16.mxu0 0
        %813 = vmatpush1.bf16.msra.mxu0 %v791
        %814 = vmatprep.subr.bf16.mxu0 0
        %815 = vmatpush1.bf16.msra.mxu0 %v792
        %816 = vmatprep.subr.bf16.mxu0 0
        %817 = vmatpush1.bf16.msra.mxu0 %v793
        %818 = vmatprep.subr.bf16.mxu0 0
        %819 = vmatpush1.bf16.msra.mxu0 0
        %820 = vmatprep.subr.bf16.mxu0 0
        %821 = vmatpush1.bf16.msra.mxu0 0
        %822 = vmatprep.subr.bf16.mxu0 0
        %823 = vmatpush1.bf16.msra.mxu0 0
        %824 = vmatprep.subr.bf16.mxu0 0
        %825 = vmatpush1.bf16.msra.mxu0 0
        %826 = vmatprep.subr.bf16.mxu0 0
        %827 = vmatpush1.bf16.msra.mxu0 0
        %828 = vmatprep.subr.bf16.mxu0 0
        %829 = vmatpush1.bf16.msra.mxu0 0
        %830 = vmatprep.subr.bf16.mxu0 0
        %831 = vmatpush1.bf16.msra.mxu0 0
        %832 = vmatprep.subr.bf16.mxu0 0
        %833 = vmatpush1.bf16.msra.mxu0 0
        %834 = vmatprep.mubr.bf16.mxu0 0
        %835 = vmatmul.mubr.bf16.gmra.mrb[0].mxu0 %v715
        %v836 = vpop.f32.mrb[0].mxu0
        %v837 = vadd.f32 %v752, %v836
        %v838 = vpop.f32.mrb[0].mxu0
        %v839 = vpop.f32.mrb[0].mxu0
        %v840 = vadd.f32 %v752, %v839
        %v841 = vpop.f32.mrb[0].mxu0
        %842 = vmatprep.mubr.bf16.mxu0 0
        %843 = vmatmul.mubr.bf16.gmra.mrb[0].mxu0 %v716
        %v844 = vpop.f32.mrb[0].mxu0
        %v845 = vadd.f32 %v752, %v844
        %v846 = vpop.f32.mrb[0].mxu0
        %v847 = vpop.f32.mrb[0].mxu0
        %v848 = vadd.f32 %v752, %v847
        %v849 = vpop.f32.mrb[0].mxu0
        %850 = vmatprep.mubr.bf16.mxu0 0
        %851 = vmatmul.mubr.bf16.gmra.mrb[0].mxu0 %v717
        %v852 = vpop.f32.mrb[0].mxu0
        %v853 = vadd.f32 %v752, %v852
        %v854 = vpop.f32.mrb[0].mxu0
        %v855 = vpop.f32.mrb[0].mxu0
        %v856 = vadd.f32 %v752, %v855
        %v857 = vpop.f32.mrb[0].mxu0
        %858 = vmatprep.mubr.bf16.mxu0 0
        %859 = vmatmul.mubr.bf16.gmra.mrb[0].mxu0 %v718
        %v860 = vpop.f32.mrb[0].mxu0
        %v861 = vadd.f32 %v752, %v860
        %v862 = vpop.f32.mrb[0].mxu0
        %v863 = vpop.f32.mrb[0].mxu0
        %v864 = vadd.f32 %v752, %v863
        %v865 = vpop.f32.mrb[0].mxu0
        %866 = vmatprep.mubr.bf16.mxu0 0
        %867 = vmatmul.mubr.bf16.gmra.mrb[0].mxu0 %v719
        %v868 = vpop.f32.mrb[0].mxu0
        %v869 = vadd.f32 %v752, %v868
        %v870 = vpop.f32.mrb[0].mxu0
        %v871 = vpop.f32.mrb[0].mxu0
        %v872 = vadd.f32 %v752, %v871
        %v873 = vpop.f32.mrb[0].mxu0
        %874 = vmatprep.mubr.bf16.mxu0 0
        %875 = vmatmul.mubr.bf16.gmra.mrb[0].mxu0 %v720
        %v876 = vpop.f32.mrb[0].mxu0
        %v877 = vadd.f32 %v752, %v876
        %v878 = vpop.f32.mrb[0].mxu0
        %v879 = vpop.f32.mrb[0].mxu0
        %v880 = vadd.f32 %v752, %v879
        %v881 = vpop.f32.mrb[0].mxu0
        %882 = vmatprep.mubr.bf16.mxu0 0
        %883 = vmatmul.mubr.bf16.gmra.mrb[0].mxu0 %v721
        %v884 = vpop.f32.mrb[0].mxu0
        %v885 = vadd.f32 %v752, %v884
        %v886 = vpop.f32.mrb[0].mxu0
        %v887 = vpop.f32.mrb[0].mxu0
        %v888 = vadd.f32 %v752, %v887
        %v889 = vpop.f32.mrb[0].mxu0
        %890 = vmatprep.mubr.bf16.mxu0 0
        %891 = vmatmul.mubr.bf16.gmra.mrb[0].mxu0 %v722
        %v892 = vpop.f32.mrb[0].mxu0
        %v893 = vadd.f32 %v752, %v892
        %v894 = vpop.f32.mrb[0].mxu0
        %v895 = vpop.f32.mrb[0].mxu0
        %v896 = vadd.f32 %v752, %v895
        %v897 = vpop.f32.mrb[0].mxu0
        %898 = vmatprep.mubr.bf16.mxu0 0
        %899 = vmatmul.mubr.bf16.gmra.mrb[0].mxu0 %v723
        %v900 = vpop.f32.mrb[0].mxu0
        %v901 = vadd.f32 %v752, %v900
        %v902 = vpop.f32.mrb[0].mxu0
        %v903 = vpop.f32.mrb[0].mxu0
        %v904 = vadd.f32 %v752, %v903
        %v905 = vpop.f32.mrb[0].mxu0
        %906 = vmatprep.mubr.bf16.mxu0 0
        %907 = vmatmul.mubr.bf16.gmra.mrb[0].mxu0 %v724
        %v908 = vpop.f32.mrb[0].mxu0
        %v909 = vadd.f32 %v752, %v908
        %v910 = vpop.f32.mrb[0].mxu0
        %v911 = vpop.f32.mrb[0].mxu0
        %v912 = vadd.f32 %v752, %v911
        %v913 = vpop.f32.mrb[0].mxu0
        %914 = vmatprep.mubr.bf16.mxu0 0
        %915 = vmatmul.mubr.bf16.gmra.mrb[0].mxu0 %v725
        %v916 = vpop.f32.mrb[0].mxu0
        %v917 = vadd.f32 %v752, %v916
        %v918 = vpop.f32.mrb[0].mxu0
        %v919 = vpop.f32.mrb[0].mxu0
        %v920 = vadd.f32 %v752, %v919
        %v921 = vpop.f32.mrb[0].mxu0
        %922 = vmatprep.mubr.bf16.mxu0 0
        %923 = vmatmul.mubr.bf16.gmra.mrb[0].mxu0 %v726
        %v924 = vpop.f32.mrb[0].mxu0
        %v925 = vadd.f32 %v752, %v924
        %v926 = vpop.f32.mrb[0].mxu0
        %v927 = vpop.f32.mrb[0].mxu0
        %v928 = vadd.f32 %v752, %v927
        %v929 = vpop.f32.mrb[0].mxu0
        %930 = vmatprep.mubr.bf16.mxu0 0
        %931 = vmatmul.mubr.bf16.gmra.mrb[0].mxu0 %v727
        %v932 = vpop.f32.mrb[0].mxu0
        %v933 = vadd.f32 %v752, %v932
        %v934 = vpop.f32.mrb[0].mxu0
        %v935 = vpop.f32.mrb[0].mxu0
        %v936 = vadd.f32 %v752, %v935
        %v937 = vpop.f32.mrb[0].mxu0
        %938 = vmatprep.mubr.bf16.mxu0 0
        %939 = vmatmul.mubr.bf16.gmra.mrb[0].mxu0 %v728
        %v940 = vpop.f32.mrb[0].mxu0
        %v941 = vadd.f32 %v752, %v940
        %v942 = vpop.f32.mrb[0].mxu0
        %v943 = vpop.f32.mrb[0].mxu0
        %v944 = vadd.f32 %v752, %v943
        %v945 = vpop.f32.mrb[0].mxu0
        %946 = vmatprep.mubr.bf16.mxu0 0
        %947 = vmatmul.mubr.bf16.gmra.mrb[0].mxu0 %v729
        %v948 = vpop.f32.mrb[0].mxu0
        %v949 = vadd.f32 %v752, %v948
        %v950 = vpop.f32.mrb[0].mxu0
        %v951 = vpop.f32.mrb[0].mxu0
        %v952 = vadd.f32 %v752, %v951
        %v953 = vpop.f32.mrb[0].mxu0
        %954 = vmatprep.mubr.bf16.mxu0 0
        %955 = vmatmul.mubr.bf16.gmra.mrb[0].mxu0 %v730
        %v956 = vpop.f32.mrb[0].mxu0
        %v957 = vadd.f32 %v752, %v956
        %v958 = vpop.f32.mrb[0].mxu0
        %v959 = vpop.f32.mrb[0].mxu0
        %v960 = vadd.f32 %v752, %v959
        %v961 = vpop.f32.mrb[0].mxu0
        %962 = vdwg.mxu0
        %v963 = vmax.f32 %v837, 0.0
        %v964 = vmax.f32 %v840, 0.0
        %v965 = vmax.f32 %v845, 0.0
        %v966 = vmax.f32 %v848, 0.0
        %v967 = vmax.f32 %v853, 0.0
        %v968 = vmax.f32 %v856, 0.0
        %v969 = vmax.f32 %v861, 0.0
        %v970 = vmax.f32 %v864, 0.0
        %v971 = vmax.f32 %v869, 0.0
        %v972 = vmax.f32 %v872, 0.0
        %v973 = vmax.f32 %v877, 0.0
        %v974 = vmax.f32 %v880, 0.0
        %v975 = vmax.f32 %v885, 0.0
        %v976 = vmax.f32 %v888, 0.0
        %v977 = vmax.f32 %v893, 0.0
        %v978 = vmax.f32 %v896, 0.0
        %v979 = vmax.f32 %v901, 0.0
        %v980 = vmax.f32 %v904, 0.0
        %v981 = vmax.f32 %v909, 0.0
        %v982 = vmax.f32 %v912, 0.0
        %v983 = vmax.f32 %v917, 0.0
        %v984 = vmax.f32 %v920, 0.0
        %v985 = vmax.f32 %v925, 0.0
        %v986 = vmax.f32 %v928, 0.0
        %v987 = vmax.f32 %v933, 0.0
        %v988 = vmax.f32 %v936, 0.0
        %v989 = vmax.f32 %v941, 0.0
        %v990 = vmax.f32 %v944, 0.0
        %v991 = vmax.f32 %v949, 0.0
        %v992 = vmax.f32 %v952, 0.0
        %v993 = vmax.f32 %v957, 0.0
        %v994 = vmax.f32 %v960, 0.0
        %v995 = vpack.c.bf16 %v964, %v963
        %v996 = vpack.c.bf16 %v966, %v965
        %v997 = vpack.c.bf16 %v968, %v967
        %v998 = vpack.c.bf16 %v970, %v969
        %v999 = vpack.c.bf16 %v972, %v971
        %v1000 = vpack.c.bf16 %v974, %v973
        %v1001 = vpack.c.bf16 %v976, %v975
        %v1002 = vpack.c.bf16 %v978, %v977
        %v1003 = vpack.c.bf16 %v980, %v979
        %v1004 = vpack.c.bf16 %v982, %v981
        %v1005 = vpack.c.bf16 %v984, %v983
        %v1006 = vpack.c.bf16 %v986, %v985
        %v1007 = vpack.c.bf16 %v988, %v987
        %v1008 = vpack.c.bf16 %v990, %v989
        %v1009 = vpack.c.bf16 %v992, %v991
        %v1010 = vpack.c.bf16 %v994, %v993
        %v1011 = vld [vmem:[%s5] sm:$0xf]
        %v1012 = vld [vmem:[%s5 + $0x4] sm:$0xf]
        %v1013 = vld [vmem:[%s5 + $0x8] sm:$0xf]
        %v1014 = vld [vmem:[%s5 + $0xc] sm:$0xf]
        %v1015 = vld [vmem:[%s5 + $0x10] sm:$0xf]
        %v1016 = vld [vmem:[%s5 + $0x14] sm:$0xf]
        %v1017 = vld [vmem:[%s5 + $0x18] sm:$0xf]
        %v1018 = vld [vmem:[%s5 + $0x1c] sm:$0xf]
        %v1019 = vld [vmem:[%s5 + $0x20] sm:$0xf]
        %v1020 = vld [vmem:[%s5 + $0x24] sm:$0xf]
        %v1021 = vld [vmem:[%s5 + $0x28] sm:$0xf]
        %v1022 = vld [vmem:[%s5 + $0x2c] sm:$0xf]
        %v1023 = vld [vmem:[%s5 + $0x30] sm:$0xf]
        %v1024 = vld [vmem:[%s5 + $0x34] sm:$0xf]
        %v1025 = vld [vmem:[%s5 + $0x38] sm:$0xf]
        %v1026 = vld [vmem:[%s5 + $0x3c] sm:$0xf]
        %v1027 = vld [vmem:[%s6] sm:$0x1]
        %v1029 = vlaneseq
        %v1030 = vshrl.u32 %v1029, 7
        %v1031 = vsub.s32 0, %v1030
        %v1032 = vrot.slane %v1027, %v1031
        %v1050 = vunpack.c.l.b16 %v1011
        %v1051 = vunpack.c.l.b16 %v1012
        %v1052 = vunpack.c.l.b16 %v1013
        %v1053 = vunpack.c.l.b16 %v1014
        %v1054 = vunpack.c.l.b16 %v1015
        %v1055 = vunpack.c.l.b16 %v1016
        %v1056 = vunpack.c.l.b16 %v1017
        %v1057 = vunpack.c.l.b16 %v1018
        %v1058 = vunpack.c.l.b16 %v1019
        %v1059 = vunpack.c.l.b16 %v1020
        %v1060 = vunpack.c.l.b16 %v1021
        %v1061 = vunpack.c.l.b16 %v1022
        %v1062 = vunpack.c.l.b16 %v1023
        %v1063 = vunpack.c.l.b16 %v1024
        %v1064 = vunpack.c.l.b16 %v1025
        %v1065 = vunpack.c.l.b16 %v1026
        %v1066 = vpack.c.b16 %v1051, %v1050
        %v1067 = vpack.c.b16 %v1053, %v1052
        %v1068 = vpack.c.b16 %v1055, %v1054
        %v1069 = vpack.c.b16 %v1057, %v1056
        %v1070 = vpack.c.b16 %v1059, %v1058
        %v1071 = vpack.c.b16 %v1061, %v1060
        %v1072 = vpack.c.b16 %v1063, %v1062
        %v1073 = vpack.c.b16 %v1065, %v1064
        %1082 = vmatprep.subr.bf16.mxu0 0
        %1083 = vmatpush1.bf16.msra.mxu0 %v1066
        %1084 = vmatprep.subr.bf16.mxu0 0
        %1085 = vmatpush1.bf16.msra.mxu0 %v1067
        %1086 = vmatprep.subr.bf16.mxu0 0
        %1087 = vmatpush1.bf16.msra.mxu0 %v1068
        %1088 = vmatprep.subr.bf16.mxu0 0
        %1089 = vmatpush1.bf16.msra.mxu0 %v1069
        %1090 = vmatprep.subr.bf16.mxu0 0
        %1091 = vmatpush1.bf16.msra.mxu0 %v1070
        %1092 = vmatprep.subr.bf16.mxu0 0
        %1093 = vmatpush1.bf16.msra.mxu0 %v1071
        %1094 = vmatprep.subr.bf16.mxu0 0
        %1095 = vmatpush1.bf16.msra.mxu0 %v1072
        %1096 = vmatprep.subr.bf16.mxu0 0
        %1097 = vmatpush1.bf16.msra.mxu0 %v1073
        %1098 = vmatprep.subr.bf16.mxu0 0
        %1099 = vmatpush1.bf16.msra.mxu0 0
        %1100 = vmatprep.subr.bf16.mxu0 0
        %1101 = vmatpush1.bf16.msra.mxu0 0
        %1102 = vmatprep.subr.bf16.mxu0 0
        %1103 = vmatpush1.bf16.msra.mxu0 0
        %1104 = vmatprep.subr.bf16.mxu0 0
        %1105 = vmatpush1.bf16.msra.mxu0 0
        %1106 = vmatprep.subr.bf16.mxu0 0
        %1107 = vmatpush1.bf16.msra.mxu0 0
        %1108 = vmatprep.subr.bf16.mxu0 0
        %1109 = vmatpush1.bf16.msra.mxu0 0
        %1110 = vmatprep.subr.bf16.mxu0 0
        %1111 = vmatpush1.bf16.msra.mxu0 0
        %1112 = vmatprep.subr.bf16.mxu0 0
        %1113 = vmatpush1.bf16.msra.mxu0 0
        %1114 = vmatprep.mubr.bf16.mxu0 0
        %1115 = vmatmul.mubr.bf16.gmra.mrb[0].mxu0 %v995
        %v1116 = vpop.f32.mrb[0].mxu0
        %v1117 = vadd.f32 %v1032, %v1116
        %v1118 = vpop.f32.mrb[0].mxu0
        %v1119 = vpop.f32.mrb[0].mxu0
        %v1120 = vadd.f32 %v1032, %v1119
        %v1121 = vpop.f32.mrb[0].mxu0
        %1122 = vmatprep.mubr.bf16.mxu0 0
        %1123 = vmatmul.mubr.bf16.gmra.mrb[0].mxu0 %v996
        %v1124 = vpop.f32.mrb[0].mxu0
        %v1125 = vadd.f32 %v1032, %v1124
        %v1126 = vpop.f32.mrb[0].mxu0
        %v1127 = vpop.f32.mrb[0].mxu0
        %v1128 = vadd.f32 %v1032, %v1127
        %v1129 = vpop.f32.mrb[0].mxu0
        %1130 = vmatprep.mubr.bf16.mxu0 0
        %1131 = vmatmul.mubr.bf16.gmra.mrb[0].mxu0 %v997
        %v1132 = vpop.f32.mrb[0].mxu0
        %v1133 = vadd.f32 %v1032, %v1132
        %v1134 = vpop.f32.mrb[0].mxu0
        %v1135 = vpop.f32.mrb[0].mxu0
        %v1136 = vadd.f32 %v1032, %v1135
        %v1137 = vpop.f32.mrb[0].mxu0
        %1138 = vmatprep.mubr.bf16.mxu0 0
        %1139 = vmatmul.mubr.bf16.gmra.mrb[0].mxu0 %v998
        %v1140 = vpop.f32.mrb[0].mxu0
        %v1141 = vadd.f32 %v1032, %v1140
        %v1142 = vpop.f32.mrb[0].mxu0
        %v1143 = vpop.f32.mrb[0].mxu0
        %v1144 = vadd.f32 %v1032, %v1143
        %v1145 = vpop.f32.mrb[0].mxu0
        %1146 = vmatprep.mubr.bf16.mxu0 0
        %1147 = vmatmul.mubr.bf16.gmra.mrb[0].mxu0 %v999
        %v1148 = vpop.f32.mrb[0].mxu0
        %v1149 = vadd.f32 %v1032, %v1148
        %v1150 = vpop.f32.mrb[0].mxu0
        %v1151 = vpop.f32.mrb[0].mxu0
        %v1152 = vadd.f32 %v1032, %v1151
        %v1153 = vpop.f32.mrb[0].mxu0
        %1154 = vmatprep.mubr.bf16.mxu0 0
        %1155 = vmatmul.mubr.bf16.gmra.mrb[0].mxu0 %v1000
        %v1156 = vpop.f32.mrb[0].mxu0
        %v1157 = vadd.f32 %v1032, %v1156
        %v1158 = vpop.f32.mrb[0].mxu0
        %v1159 = vpop.f32.mrb[0].mxu0
        %v1160 = vadd.f32 %v1032, %v1159
        %v1161 = vpop.f32.mrb[0].mxu0
        %1162 = vmatprep.mubr.bf16.mxu0 0
        %1163 = vmatmul.mubr.bf16.gmra.mrb[0].mxu0 %v1001
        %v1164 = vpop.f32.mrb[0].mxu0
        %v1165 = vadd.f32 %v1032, %v1164
        %v1166 = vpop.f32.mrb[0].mxu0
        %v1167 = vpop.f32.mrb[0].mxu0
        %v1168 = vadd.f32 %v1032, %v1167
        %v1169 = vpop.f32.mrb[0].mxu0
        %1170 = vmatprep.mubr.bf16.mxu0 0
        %1171 = vmatmul.mubr.bf16.gmra.mrb[0].mxu0 %v1002
        %v1172 = vpop.f32.mrb[0].mxu0
        %v1173 = vadd.f32 %v1032, %v1172
        %v1174 = vpop.f32.mrb[0].mxu0
        %v1175 = vpop.f32.mrb[0].mxu0
        %v1176 = vadd.f32 %v1032, %v1175
        %v1177 = vpop.f32.mrb[0].mxu0
        %1178 = vmatprep.mubr.bf16.mxu0 0
        %1179 = vmatmul.mubr.bf16.gmra.mrb[0].mxu0 %v1003
        %v1180 = vpop.f32.mrb[0].mxu0
        %v1181 = vadd.f32 %v1032, %v1180
        %v1182 = vpop.f32.mrb[0].mxu0
        %v1183 = vpop.f32.mrb[0].mxu0
        %v1184 = vadd.f32 %v1032, %v1183
        %v1185 = vpop.f32.mrb[0].mxu0
        %1186 = vmatprep.mubr.bf16.mxu0 0
        %1187 = vmatmul.mubr.bf16.gmra.mrb[0].mxu0 %v1004
        %v1188 = vpop.f32.mrb[0].mxu0
        %v1189 = vadd.f32 %v1032, %v1188
        %v1190 = vpop.f32.mrb[0].mxu0
        %v1191 = vpop.f32.mrb[0].mxu0
        %v1192 = vadd.f32 %v1032, %v1191
        %v1193 = vpop.f32.mrb[0].mxu0
        %1194 = vmatprep.mubr.bf16.mxu0 0
        %1195 = vmatmul.mubr.bf16.gmra.mrb[0].mxu0 %v1005
        %v1196 = vpop.f32.mrb[0].mxu0
        %v1197 = vadd.f32 %v1032, %v1196
        %v1198 = vpop.f32.mrb[0].mxu0
        %v1199 = vpop.f32.mrb[0].mxu0
        %v1200 = vadd.f32 %v1032, %v1199
        %v1201 = vpop.f32.mrb[0].mxu0
        %1202 = vmatprep.mubr.bf16.mxu0 0
        %1203 = vmatmul.mubr.bf16.gmra.mrb[0].mxu0 %v1006
        %v1204 = vpop.f32.mrb[0].mxu0
        %v1205 = vadd.f32 %v1032, %v1204
        %v1206 = vpop.f32.mrb[0].mxu0
        %v1207 = vpop.f32.mrb[0].mxu0
        %v1208 = vadd.f32 %v1032, %v1207
        %v1209 = vpop.f32.mrb[0].mxu0
        %1210 = vmatprep.mubr.bf16.mxu0 0
        %1211 = vmatmul.mubr.bf16.gmra.mrb[0].mxu0 %v1007
        %v1212 = vpop.f32.mrb[0].mxu0
        %v1213 = vadd.f32 %v1032, %v1212
        %v1214 = vpop.f32.mrb[0].mxu0
        %v1215 = vpop.f32.mrb[0].mxu0
        %v1216 = vadd.f32 %v1032, %v1215
        %v1217 = vpop.f32.mrb[0].mxu0
        %1218 = vmatprep.mubr.bf16.mxu0 0
        %1219 = vmatmul.mubr.bf16.gmra.mrb[0].mxu0 %v1008
        %v1220 = vpop.f32.mrb[0].mxu0
        %v1221 = vadd.f32 %v1032, %v1220
        %v1222 = vpop.f32.mrb[0].mxu0
        %v1223 = vpop.f32.mrb[0].mxu0
        %v1224 = vadd.f32 %v1032, %v1223
        %v1225 = vpop.f32.mrb[0].mxu0
        %1226 = vmatprep.mubr.bf16.mxu0 0
        %1227 = vmatmul.mubr.bf16.gmra.mrb[0].mxu0 %v1009
        %v1228 = vpop.f32.mrb[0].mxu0
        %v1229 = vadd.f32 %v1032, %v1228
        %v1230 = vpop.f32.mrb[0].mxu0
        %v1231 = vpop.f32.mrb[0].mxu0
        %v1232 = vadd.f32 %v1032, %v1231
        %v1233 = vpop.f32.mrb[0].mxu0
        %1234 = vmatprep.mubr.bf16.mxu0 0
        %1235 = vmatmul.mubr.bf16.gmra.mrb[0].mxu0 %v1010
        %v1236 = vpop.f32.mrb[0].mxu0
        %v1237 = vadd.f32 %v1032, %v1236
        %v1238 = vpop.f32.mrb[0].mxu0
        %v1239 = vpop.f32.mrb[0].mxu0
        %v1240 = vadd.f32 %v1032, %v1239
        %v1241 = vpop.f32.mrb[0].mxu0
        %1242 = vdwg.mxu0
        %v1243 = vmax.f32 %v1117, 0.0
        %v1244 = vmax.f32 %v1120, 0.0
        %v1245 = vmax.f32 %v1125, 0.0
        %v1246 = vmax.f32 %v1128, 0.0
        %v1247 = vmax.f32 %v1133, 0.0
        %v1248 = vmax.f32 %v1136, 0.0
        %v1249 = vmax.f32 %v1141, 0.0
        %v1250 = vmax.f32 %v1144, 0.0
        %v1251 = vmax.f32 %v1149, 0.0
        %v1252 = vmax.f32 %v1152, 0.0
        %v1253 = vmax.f32 %v1157, 0.0
        %v1254 = vmax.f32 %v1160, 0.0
        %v1255 = vmax.f32 %v1165, 0.0
        %v1256 = vmax.f32 %v1168, 0.0
        %v1257 = vmax.f32 %v1173, 0.0
        %v1258 = vmax.f32 %v1176, 0.0
        %v1259 = vmax.f32 %v1181, 0.0
        %v1260 = vmax.f32 %v1184, 0.0
        %v1261 = vmax.f32 %v1189, 0.0
        %v1262 = vmax.f32 %v1192, 0.0
        %v1263 = vmax.f32 %v1197, 0.0
        %v1264 = vmax.f32 %v1200, 0.0
        %v1265 = vmax.f32 %v1205, 0.0
        %v1266 = vmax.f32 %v1208, 0.0
        %v1267 = vmax.f32 %v1213, 0.0
        %v1268 = vmax.f32 %v1216, 0.0
        %v1269 = vmax.f32 %v1221, 0.0
        %v1270 = vmax.f32 %v1224, 0.0
        %v1271 = vmax.f32 %v1229, 0.0
        %v1272 = vmax.f32 %v1232, 0.0
        %v1273 = vmax.f32 %v1237, 0.0
        %v1274 = vmax.f32 %v1240, 0.0
        %v1275 = vpack.c.bf16 %v1244, %v1243
        %v1276 = vpack.c.bf16 %v1246, %v1245
        %v1277 = vpack.c.bf16 %v1248, %v1247
        %v1278 = vpack.c.bf16 %v1250, %v1249
        %v1279 = vpack.c.bf16 %v1252, %v1251
        %v1280 = vpack.c.bf16 %v1254, %v1253
        %v1281 = vpack.c.bf16 %v1256, %v1255
        %v1282 = vpack.c.bf16 %v1258, %v1257
        %v1283 = vpack.c.bf16 %v1260, %v1259
        %v1284 = vpack.c.bf16 %v1262, %v1261
        %v1285 = vpack.c.bf16 %v1264, %v1263
        %v1286 = vpack.c.bf16 %v1266, %v1265
        %v1287 = vpack.c.bf16 %v1268, %v1267
        %v1288 = vpack.c.bf16 %v1270, %v1269
        %v1289 = vpack.c.bf16 %v1272, %v1271
        %v1290 = vpack.c.bf16 %v1274, %v1273
        %v1291 = vld [vmem:[%s7] sm:$0xf]
        %v1292 = vld [vmem:[%s7 + $0x4] sm:$0xf]
        %v1293 = vld [vmem:[%s7 + $0x8] sm:$0xf]
        %v1294 = vld [vmem:[%s7 + $0xc] sm:$0xf]
        %v1295 = vld [vmem:[%s7 + $0x10] sm:$0xf]
        %v1296 = vld [vmem:[%s7 + $0x14] sm:$0xf]
        %v1297 = vld [vmem:[%s7 + $0x18] sm:$0xf]
        %v1298 = vld [vmem:[%s7 + $0x1c] sm:$0xf]
        %v1299 = vld [vmem:[%s7 + $0x20] sm:$0xf]
        %v1300 = vld [vmem:[%s7 + $0x24] sm:$0xf]
        %v1301 = vld [vmem:[%s7 + $0x28] sm:$0xf]
        %v1302 = vld [vmem:[%s7 + $0x2c] sm:$0xf]
        %v1303 = vld [vmem:[%s7 + $0x30] sm:$0xf]
        %v1304 = vld [vmem:[%s7 + $0x34] sm:$0xf]
        %v1305 = vld [vmem:[%s7 + $0x38] sm:$0xf]
        %v1306 = vld [vmem:[%s7 + $0x3c] sm:$0xf]
        %v1307 = vld [vmem:[%s8] sm:$0x1]
        %v1309 = vlaneseq
        %v1310 = vshrl.u32 %v1309, 7
        %v1311 = vsub.s32 0, %v1310
        %v1312 = vrot.slane %v1307, %v1311
        %v1330 = vunpack.c.l.b16 %v1291
        %v1331 = vunpack.c.l.b16 %v1292
        %v1332 = vunpack.c.l.b16 %v1293
        %v1333 = vunpack.c.l.b16 %v1294
        %v1334 = vunpack.c.l.b16 %v1295
        %v1335 = vunpack.c.l.b16 %v1296
        %v1336 = vunpack.c.l.b16 %v1297
        %v1337 = vunpack.c.l.b16 %v1298
        %v1338 = vunpack.c.l.b16 %v1299
        %v1339 = vunpack.c.l.b16 %v1300
        %v1340 = vunpack.c.l.b16 %v1301
        %v1341 = vunpack.c.l.b16 %v1302
        %v1342 = vunpack.c.l.b16 %v1303
        %v1343 = vunpack.c.l.b16 %v1304
        %v1344 = vunpack.c.l.b16 %v1305
        %v1345 = vunpack.c.l.b16 %v1306
        %v1346 = vpack.c.b16 %v1331, %v1330
        %v1347 = vpack.c.b16 %v1333, %v1332
        %v1348 = vpack.c.b16 %v1335, %v1334
        %v1349 = vpack.c.b16 %v1337, %v1336
        %v1350 = vpack.c.b16 %v1339, %v1338
        %v1351 = vpack.c.b16 %v1341, %v1340
        %v1352 = vpack.c.b16 %v1343, %v1342
        %v1353 = vpack.c.b16 %v1345, %v1344
        %1362 = vmatprep.subr.bf16.mxu0 0
        %1363 = vmatpush1.bf16.msra.mxu0 %v1346
        %1364 = vmatprep.subr.bf16.mxu0 0
        %1365 = vmatpush1.bf16.msra.mxu0 %v1347
        %1366 = vmatprep.subr.bf16.mxu0 0
        %1367 = vmatpush1.bf16.msra.mxu0 %v1348
        %1368 = vmatprep.subr.bf16.mxu0 0
        %1369 = vmatpush1.bf16.msra.mxu0 %v1349
        %1370 = vmatprep.subr.bf16.mxu0 0
        %1371 = vmatpush1.bf16.msra.mxu0 %v1350
        %1372 = vmatprep.subr.bf16.mxu0 0
        %1373 = vmatpush1.bf16.msra.mxu0 %v1351
        %1374 = vmatprep.subr.bf16.mxu0 0
        %1375 = vmatpush1.bf16.msra.mxu0 %v1352
        %1376 = vmatprep.subr.bf16.mxu0 0
        %1377 = vmatpush1.bf16.msra.mxu0 %v1353
        %1378 = vmatprep.subr.bf16.mxu0 0
        %1379 = vmatpush1.bf16.msra.mxu0 0
        %1380 = vmatprep.subr.bf16.mxu0 0
        %1381 = vmatpush1.bf16.msra.mxu0 0
        %1382 = vmatprep.subr.bf16.mxu0 0
        %1383 = vmatpush1.bf16.msra.mxu0 0
        %1384 = vmatprep.subr.bf16.mxu0 0
        %1385 = vmatpush1.bf16.msra.mxu0 0
        %1386 = vmatprep.subr.bf16.mxu0 0
        %1387 = vmatpush1.bf16.msra.mxu0 0
        %1388 = vmatprep.subr.bf16.mxu0 0
        %1389 = vmatpush1.bf16.msra.mxu0 0
        %1390 = vmatprep.subr.bf16.mxu0 0
        %1391 = vmatpush1.bf16.msra.mxu0 0
        %1392 = vmatprep.subr.bf16.mxu0 0
        %1393 = vmatpush1.bf16.msra.mxu0 0
        %1394 = vmatprep.mubr.bf16.mxu0 0
        %1395 = vmatmul.mubr.bf16.gmra.mrb[0].mxu0 %v1275
        %v1396 = vpop.f32.mrb[0].mxu0
        %v1397 = vadd.f32 %v1312, %v1396
        %v1398 = vpop.f32.mrb[0].mxu0
        %v1399 = vpop.f32.mrb[0].mxu0
        %v1400 = vadd.f32 %v1312, %v1399
        %v1401 = vpop.f32.mrb[0].mxu0
        %1402 = vmatprep.mubr.bf16.mxu0 0
        %1403 = vmatmul.mubr.bf16.gmra.mrb[0].mxu0 %v1276
        %v1404 = vpop.f32.mrb[0].mxu0
        %v1405 = vadd.f32 %v1312, %v1404
        %v1406 = vpop.f32.mrb[0].mxu0
        %v1407 = vpop.f32.mrb[0].mxu0
        %v1408 = vadd.f32 %v1312, %v1407
        %v1409 = vpop.f32.mrb[0].mxu0
        %1410 = vmatprep.mubr.bf16.mxu0 0
        %1411 = vmatmul.mubr.bf16.gmra.mrb[0].mxu0 %v1277
        %v1412 = vpop.f32.mrb[0].mxu0
        %v1413 = vadd.f32 %v1312, %v1412
        %v1414 = vpop.f32.mrb[0].mxu0
        %v1415 = vpop.f32.mrb[0].mxu0
        %v1416 = vadd.f32 %v1312, %v1415
        %v1417 = vpop.f32.mrb[0].mxu0
        %1418 = vmatprep.mubr.bf16.mxu0 0
        %1419 = vmatmul.mubr.bf16.gmra.mrb[0].mxu0 %v1278
        %v1420 = vpop.f32.mrb[0].mxu0
        %v1421 = vadd.f32 %v1312, %v1420
        %v1422 = vpop.f32.mrb[0].mxu0
        %v1423 = vpop.f32.mrb[0].mxu0
        %v1424 = vadd.f32 %v1312, %v1423
        %v1425 = vpop.f32.mrb[0].mxu0
        %1426 = vmatprep.mubr.bf16.mxu0 0
        %1427 = vmatmul.mubr.bf16.gmra.mrb[0].mxu0 %v1279
        %v1428 = vpop.f32.mrb[0].mxu0
        %v1429 = vadd.f32 %v1312, %v1428
        %v1430 = vpop.f32.mrb[0].mxu0
        %v1431 = vpop.f32.mrb[0].mxu0
        %v1432 = vadd.f32 %v1312, %v1431
        %v1433 = vpop.f32.mrb[0].mxu0
        %1434 = vmatprep.mubr.bf16.mxu0 0
        %1435 = vmatmul.mubr.bf16.gmra.mrb[0].mxu0 %v1280
        %v1436 = vpop.f32.mrb[0].mxu0
        %v1437 = vadd.f32 %v1312, %v1436
        %v1438 = vpop.f32.mrb[0].mxu0
        %v1439 = vpop.f32.mrb[0].mxu0
        %v1440 = vadd.f32 %v1312, %v1439
        %v1441 = vpop.f32.mrb[0].mxu0
        %1442 = vmatprep.mubr.bf16.mxu0 0
        %1443 = vmatmul.mubr.bf16.gmra.mrb[0].mxu0 %v1281
        %v1444 = vpop.f32.mrb[0].mxu0
        %v1445 = vadd.f32 %v1312, %v1444
        %v1446 = vpop.f32.mrb[0].mxu0
        %v1447 = vpop.f32.mrb[0].mxu0
        %v1448 = vadd.f32 %v1312, %v1447
        %v1449 = vpop.f32.mrb[0].mxu0
        %1450 = vmatprep.mubr.bf16.mxu0 0
        %1451 = vmatmul.mubr.bf16.gmra.mrb[0].mxu0 %v1282
        %v1452 = vpop.f32.mrb[0].mxu0
        %v1453 = vadd.f32 %v1312, %v1452
        %v1454 = vpop.f32.mrb[0].mxu0
        %v1455 = vpop.f32.mrb[0].mxu0
        %v1456 = vadd.f32 %v1312, %v1455
        %v1457 = vpop.f32.mrb[0].mxu0
        %1458 = vmatprep.mubr.bf16.mxu0 0
        %1459 = vmatmul.mubr.bf16.gmra.mrb[0].mxu0 %v1283
        %v1460 = vpop.f32.mrb[0].mxu0
        %v1461 = vadd.f32 %v1312, %v1460
        %v1462 = vpop.f32.mrb[0].mxu0
        %v1463 = vpop.f32.mrb[0].mxu0
        %v1464 = vadd.f32 %v1312, %v1463
        %v1465 = vpop.f32.mrb[0].mxu0
        %1466 = vmatprep.mubr.bf16.mxu0 0
        %1467 = vmatmul.mubr.bf16.gmra.mrb[0].mxu0 %v1284
        %v1468 = vpop.f32.mrb[0].mxu0
        %v1469 = vadd.f32 %v1312, %v1468
        %v1470 = vpop.f32.mrb[0].mxu0
        %v1471 = vpop.f32.mrb[0].mxu0
        %v1472 = vadd.f32 %v1312, %v1471
        %v1473 = vpop.f32.mrb[0].mxu0
        %1474 = vmatprep.mubr.bf16.mxu0 0
        %1475 = vmatmul.mubr.bf16.gmra.mrb[0].mxu0 %v1285
        %v1476 = vpop.f32.mrb[0].mxu0
        %v1477 = vadd.f32 %v1312, %v1476
        %v1478 = vpop.f32.mrb[0].mxu0
        %v1479 = vpop.f32.mrb[0].mxu0
        %v1480 = vadd.f32 %v1312, %v1479
        %v1481 = vpop.f32.mrb[0].mxu0
        %1482 = vmatprep.mubr.bf16.mxu0 0
        %1483 = vmatmul.mubr.bf16.gmra.mrb[0].mxu0 %v1286
        %v1484 = vpop.f32.mrb[0].mxu0
        %v1485 = vadd.f32 %v1312, %v1484
        %v1486 = vpop.f32.mrb[0].mxu0
        %v1487 = vpop.f32.mrb[0].mxu0
        %v1488 = vadd.f32 %v1312, %v1487
        %v1489 = vpop.f32.mrb[0].mxu0
        %1490 = vmatprep.mubr.bf16.mxu0 0
        %1491 = vmatmul.mubr.bf16.gmra.mrb[0].mxu0 %v1287
        %v1492 = vpop.f32.mrb[0].mxu0
        %v1493 = vadd.f32 %v1312, %v1492
        %v1494 = vpop.f32.mrb[0].mxu0
        %v1495 = vpop.f32.mrb[0].mxu0
        %v1496 = vadd.f32 %v1312, %v1495
        %v1497 = vpop.f32.mrb[0].mxu0
        %1498 = vmatprep.mubr.bf16.mxu0 0
        %1499 = vmatmul.mubr.bf16.gmra.mrb[0].mxu0 %v1288
        %v1500 = vpop.f32.mrb[0].mxu0
        %v1501 = vadd.f32 %v1312, %v1500
        %v1502 = vpop.f32.mrb[0].mxu0
        %v1503 = vpop.f32.mrb[0].mxu0
        %v1504 = vadd.f32 %v1312, %v1503
        %v1505 = vpop.f32.mrb[0].mxu0
        %1506 = vmatprep.mubr.bf16.mxu0 0
        %1507 = vmatmul.mubr.bf16.gmra.mrb[0].mxu0 %v1289
        %v1508 = vpop.f32.mrb[0].mxu0
        %v1509 = vadd.f32 %v1312, %v1508
        %v1510 = vpop.f32.mrb[0].mxu0
        %v1511 = vpop.f32.mrb[0].mxu0
        %v1512 = vadd.f32 %v1312, %v1511
        %v1513 = vpop.f32.mrb[0].mxu0
        %1514 = vmatprep.mubr.bf16.mxu0 0
        %1515 = vmatmul.mubr.bf16.gmra.mrb[0].mxu0 %v1290
        %v1516 = vpop.f32.mrb[0].mxu0
        %v1517 = vadd.f32 %v1312, %v1516
        %v1518 = vpop.f32.mrb[0].mxu0
        %v1519 = vpop.f32.mrb[0].mxu0
        %v1520 = vadd.f32 %v1312, %v1519
        %v1521 = vpop.f32.mrb[0].mxu0
        %1522 = vdwg.mxu0
        %v1523 = vmax.f32 %v1397, 0.0
        %v1524 = vmax.f32 %v1400, 0.0
        %v1525 = vmax.f32 %v1405, 0.0
        %v1526 = vmax.f32 %v1408, 0.0
        %v1527 = vmax.f32 %v1413, 0.0
        %v1528 = vmax.f32 %v1416, 0.0
        %v1529 = vmax.f32 %v1421, 0.0
        %v1530 = vmax.f32 %v1424, 0.0
        %v1531 = vmax.f32 %v1429, 0.0
        %v1532 = vmax.f32 %v1432, 0.0
        %v1533 = vmax.f32 %v1437, 0.0
        %v1534 = vmax.f32 %v1440, 0.0
        %v1535 = vmax.f32 %v1445, 0.0
        %v1536 = vmax.f32 %v1448, 0.0
        %v1537 = vmax.f32 %v1453, 0.0
        %v1538 = vmax.f32 %v1456, 0.0
        %v1539 = vmax.f32 %v1461, 0.0
        %v1540 = vmax.f32 %v1464, 0.0
        %v1541 = vmax.f32 %v1469, 0.0
        %v1542 = vmax.f32 %v1472, 0.0
        %v1543 = vmax.f32 %v1477, 0.0
        %v1544 = vmax.f32 %v1480, 0.0
        %v1545 = vmax.f32 %v1485, 0.0
        %v1546 = vmax.f32 %v1488, 0.0
        %v1547 = vmax.f32 %v1493, 0.0
        %v1548 = vmax.f32 %v1496, 0.0
        %v1549 = vmax.f32 %v1501, 0.0
        %v1550 = vmax.f32 %v1504, 0.0
        %v1551 = vmax.f32 %v1509, 0.0
        %v1552 = vmax.f32 %v1512, 0.0
        %v1553 = vmax.f32 %v1517, 0.0
        %v1554 = vmax.f32 %v1520, 0.0
        %v1555 = vld [vmem:[%s9] sm:$0x1]
        %v1557 = vlaneseq
        %v1558 = vshrl.u32 %v1557, 7
        %v1559 = vsub.s32 0, %v1558
        %v1560 = vrot.slane %v1555, %v1559
        %v1562 = vmul.f32 %v1523, %v1560
        %v1563 = vmul.f32 %v1524, %v1560
        %v1564 = vmul.f32 %v1525, %v1560
        %v1565 = vmul.f32 %v1526, %v1560
        %v1566 = vmul.f32 %v1527, %v1560
        %v1567 = vmul.f32 %v1528, %v1560
        %v1568 = vmul.f32 %v1529, %v1560
        %v1569 = vmul.f32 %v1530, %v1560
        %v1570 = vmul.f32 %v1531, %v1560
        %v1571 = vmul.f32 %v1532, %v1560
        %v1572 = vmul.f32 %v1533, %v1560
        %v1573 = vmul.f32 %v1534, %v1560
        %v1574 = vmul.f32 %v1535, %v1560
        %v1575 = vmul.f32 %v1536, %v1560
        %v1576 = vmul.f32 %v1537, %v1560
        %v1577 = vmul.f32 %v1538, %v1560
        %v1578 = vmul.f32 %v1539, %v1560
        %v1579 = vmul.f32 %v1540, %v1560
        %v1580 = vmul.f32 %v1541, %v1560
        %v1581 = vmul.f32 %v1542, %v1560
        %v1582 = vmul.f32 %v1543, %v1560
        %v1583 = vmul.f32 %v1544, %v1560
        %v1584 = vmul.f32 %v1545, %v1560
        %v1585 = vmul.f32 %v1546, %v1560
        %v1586 = vmul.f32 %v1547, %v1560
        %v1587 = vmul.f32 %v1548, %v1560
        %v1588 = vmul.f32 %v1549, %v1560
        %v1589 = vmul.f32 %v1550, %v1560
        %v1590 = vmul.f32 %v1551, %v1560
        %v1591 = vmul.f32 %v1552, %v1560
        %v1592 = vmul.f32 %v1553, %v1560
        %v1593 = vmul.f32 %v1554, %v1560
        %1594 = vadd.xlane.f32.xlu0 %v1562
        %v1595 = vpop.xlane.xlu0 %1594
        %1596 = vadd.xlane.f32.xlu0 %v1563
        %v1597 = vpop.xlane.xlu0 %1596
        %1598 = vadd.xlane.f32.xlu0 %v1564
        %v1599 = vpop.xlane.xlu0 %1598
        %1600 = vadd.xlane.f32.xlu0 %v1565
        %v1601 = vpop.xlane.xlu0 %1600
        %1602 = vadd.xlane.f32.xlu0 %v1566
        %v1603 = vpop.xlane.xlu0 %1602
        %1604 = vadd.xlane.f32.xlu0 %v1567
        %v1605 = vpop.xlane.xlu0 %1604
        %1606 = vadd.xlane.f32.xlu0 %v1568
        %v1607 = vpop.xlane.xlu0 %1606
        %1608 = vadd.xlane.f32.xlu0 %v1569
        %v1609 = vpop.xlane.xlu0 %1608
        %1610 = vadd.xlane.f32.xlu0 %v1570
        %v1611 = vpop.xlane.xlu0 %1610
        %1612 = vadd.xlane.f32.xlu0 %v1571
        %v1613 = vpop.xlane.xlu0 %1612
        %1614 = vadd.xlane.f32.xlu0 %v1572
        %v1615 = vpop.xlane.xlu0 %1614
        %1616 = vadd.xlane.f32.xlu0 %v1573
        %v1617 = vpop.xlane.xlu0 %1616
        %1618 = vadd.xlane.f32.xlu0 %v1574
        %v1619 = vpop.xlane.xlu0 %1618
        %1620 = vadd.xlane.f32.xlu0 %v1575
        %v1621 = vpop.xlane.xlu0 %1620
        %1622 = vadd.xlane.f32.xlu0 %v1576
        %v1623 = vpop.xlane.xlu0 %1622
        %1624 = vadd.xlane.f32.xlu0 %v1577
        %v1625 = vpop.xlane.xlu0 %1624
        %1626 = vadd.xlane.f32.xlu0 %v1578
        %v1627 = vpop.xlane.xlu0 %1626
        %1628 = vadd.xlane.f32.xlu0 %v1579
        %v1629 = vpop.xlane.xlu0 %1628
        %1630 = vadd.xlane.f32.xlu0 %v1580
        %v1631 = vpop.xlane.xlu0 %1630
        %1632 = vadd.xlane.f32.xlu0 %v1581
        %v1633 = vpop.xlane.xlu0 %1632
        %1634 = vadd.xlane.f32.xlu0 %v1582
        %v1635 = vpop.xlane.xlu0 %1634
        %1636 = vadd.xlane.f32.xlu0 %v1583
        %v1637 = vpop.xlane.xlu0 %1636
        %1638 = vadd.xlane.f32.xlu0 %v1584
        %v1639 = vpop.xlane.xlu0 %1638
        %1640 = vadd.xlane.f32.xlu0 %v1585
        %v1641 = vpop.xlane.xlu0 %1640
        %1642 = vadd.xlane.f32.xlu0 %v1586
        %v1643 = vpop.xlane.xlu0 %1642
        %1644 = vadd.xlane.f32.xlu0 %v1587
        %v1645 = vpop.xlane.xlu0 %1644
        %1646 = vadd.xlane.f32.xlu0 %v1588
        %v1647 = vpop.xlane.xlu0 %1646
        %1648 = vadd.xlane.f32.xlu0 %v1589
        %v1649 = vpop.xlane.xlu0 %1648
        %1650 = vadd.xlane.f32.xlu0 %v1590
        %v1651 = vpop.xlane.xlu0 %1650
        %1652 = vadd.xlane.f32.xlu0 %v1591
        %v1653 = vpop.xlane.xlu0 %1652
        %1654 = vadd.xlane.f32.xlu0 %v1592
        %v1655 = vpop.xlane.xlu0 %1654
        %1656 = vadd.xlane.f32.xlu0 %v1593
        %v1657 = vpop.xlane.xlu0 %1656
        %s1658 = sld [smem:[#allocation2]]
        %v1659 = vstv %s1658
        %v1660 = vadd.f32 %v1595, %v1659
        %v1661 = vadd.f32 %v1597, %v1659
        %v1662 = vadd.f32 %v1599, %v1659
        %v1663 = vadd.f32 %v1601, %v1659
        %v1664 = vadd.f32 %v1603, %v1659
        %v1665 = vadd.f32 %v1605, %v1659
        %v1666 = vadd.f32 %v1607, %v1659
        %v1667 = vadd.f32 %v1609, %v1659
        %v1668 = vadd.f32 %v1611, %v1659
        %v1669 = vadd.f32 %v1613, %v1659
        %v1670 = vadd.f32 %v1615, %v1659
        %v1671 = vadd.f32 %v1617, %v1659
        %v1672 = vadd.f32 %v1619, %v1659
        %v1673 = vadd.f32 %v1621, %v1659
        %v1674 = vadd.f32 %v1623, %v1659
        %v1675 = vadd.f32 %v1625, %v1659
        %v1676 = vadd.f32 %v1627, %v1659
        %v1677 = vadd.f32 %v1629, %v1659
        %v1678 = vadd.f32 %v1631, %v1659
        %v1679 = vadd.f32 %v1633, %v1659
        %v1680 = vadd.f32 %v1635, %v1659
        %v1681 = vadd.f32 %v1637, %v1659
        %v1682 = vadd.f32 %v1639, %v1659
        %v1683 = vadd.f32 %v1641, %v1659
        %v1684 = vadd.f32 %v1643, %v1659
        %v1685 = vadd.f32 %v1645, %v1659
        %v1686 = vadd.f32 %v1647, %v1659
        %v1687 = vadd.f32 %v1649, %v1659
        %v1688 = vadd.f32 %v1651, %v1659
        %v1689 = vadd.f32 %v1653, %v1659
        %v1690 = vadd.f32 %v1655, %v1659
        %v1691 = vadd.f32 %v1657, %v1659
        %v1692 = vxor.u32 %v1660, 2147483648
        %v1693 = vxor.u32 %v1661, 2147483648
        %v1694 = vxor.u32 %v1662, 2147483648
        %v1695 = vxor.u32 %v1663, 2147483648
        %v1696 = vxor.u32 %v1664, 2147483648
        %v1697 = vxor.u32 %v1665, 2147483648
        %v1698 = vxor.u32 %v1666, 2147483648
        %v1699 = vxor.u32 %v1667, 2147483648
        %v1700 = vxor.u32 %v1668, 2147483648
        %v1701 = vxor.u32 %v1669, 2147483648
        %v1702 = vxor.u32 %v1670, 2147483648
        %v1703 = vxor.u32 %v1671, 2147483648
        %v1704 = vxor.u32 %v1672, 2147483648
        %v1705 = vxor.u32 %v1673, 2147483648
        %v1706 = vxor.u32 %v1674, 2147483648
        %v1707 = vxor.u32 %v1675, 2147483648
        %v1708 = vxor.u32 %v1676, 2147483648
        %v1709 = vxor.u32 %v1677, 2147483648
        %v1710 = vxor.u32 %v1678, 2147483648
        %v1711 = vxor.u32 %v1679, 2147483648
        %v1712 = vxor.u32 %v1680, 2147483648
        %v1713 = vxor.u32 %v1681, 2147483648
        %v1714 = vxor.u32 %v1682, 2147483648
        %v1715 = vxor.u32 %v1683, 2147483648
        %v1716 = vxor.u32 %v1684, 2147483648
        %v1717 = vxor.u32 %v1685, 2147483648
        %v1718 = vxor.u32 %v1686, 2147483648
        %v1719 = vxor.u32 %v1687, 2147483648
        %v1720 = vxor.u32 %v1688, 2147483648
        %v1721 = vxor.u32 %v1689, 2147483648
        %v1722 = vxor.u32 %v1690, 2147483648
        %v1723 = vxor.u32 %v1691, 2147483648
        %v1724 = vmul.f32 %v1692, 1.442695
        %v1725 = vpow.pop %v1724
        %v1726 = vmul.f32 %v1693, 1.442695
        %v1727 = vpow.pop %v1726
        %v1728 = vmul.f32 %v1694, 1.442695
        %v1729 = vpow.pop %v1728
        %v1730 = vmul.f32 %v1695, 1.442695
        %v1731 = vpow.pop %v1730
        %v1732 = vmul.f32 %v1696, 1.442695
        %v1733 = vpow.pop %v1732
        %v1734 = vmul.f32 %v1697, 1.442695
        %v1735 = vpow.pop %v1734
        %v1736 = vmul.f32 %v1698, 1.442695
        %v1737 = vpow.pop %v1736
        %v1738 = vmul.f32 %v1699, 1.442695
        %v1739 = vpow.pop %v1738
        %v1740 = vmul.f32 %v1700, 1.442695
        %v1741 = vpow.pop %v1740
        %v1742 = vmul.f32 %v1701, 1.442695
        %v1743 = vpow.pop %v1742
        %v1744 = vmul.f32 %v1702, 1.442695
        %v1745 = vpow.pop %v1744
        %v1746 = vmul.f32 %v1703, 1.442695
        %v1747 = vpow.pop %v1746
        %v1748 = vmul.f32 %v1704, 1.442695
        %v1749 = vpow.pop %v1748
        %v1750 = vmul.f32 %v1705, 1.442695
        %v1751 = vpow.pop %v1750
        %v1752 = vmul.f32 %v1706, 1.442695
        %v1753 = vpow.pop %v1752
        %v1754 = vmul.f32 %v1707, 1.442695
        %v1755 = vpow.pop %v1754
        %v1756 = vmul.f32 %v1708, 1.442695
        %v1757 = vpow.pop %v1756
        %v1758 = vmul.f32 %v1709, 1.442695
        %v1759 = vpow.pop %v1758
        %v1760 = vmul.f32 %v1710, 1.442695
        %v1761 = vpow.pop %v1760
        %v1762 = vmul.f32 %v1711, 1.442695
        %v1763 = vpow.pop %v1762
        %v1764 = vmul.f32 %v1712, 1.442695
        %v1765 = vpow.pop %v1764
        %v1766 = vmul.f32 %v1713, 1.442695
        %v1767 = vpow.pop %v1766
        %v1768 = vmul.f32 %v1714, 1.442695
        %v1769 = vpow.pop %v1768
        %v1770 = vmul.f32 %v1715, 1.442695
        %v1771 = vpow.pop %v1770
        %v1772 = vmul.f32 %v1716, 1.442695
        %v1773 = vpow.pop %v1772
        %v1774 = vmul.f32 %v1717, 1.442695
        %v1775 = vpow.pop %v1774
        %v1776 = vmul.f32 %v1718, 1.442695
        %v1777 = vpow.pop %v1776
        %v1778 = vmul.f32 %v1719, 1.442695
        %v1779 = vpow.pop %v1778
        %v1780 = vmul.f32 %v1720, 1.442695
        %v1781 = vpow.pop %v1780
        %v1782 = vmul.f32 %v1721, 1.442695
        %v1783 = vpow.pop %v1782
        %v1784 = vmul.f32 %v1722, 1.442695
        %v1785 = vpow.pop %v1784
        %v1786 = vmul.f32 %v1723, 1.442695
        %v1787 = vpow.pop %v1786
        %v1788 = vadd.f32 %v1725, 1.0
        %v1789 = vadd.f32 %v1727, 1.0
        %v1790 = vadd.f32 %v1729, 1.0
        %v1791 = vadd.f32 %v1731, 1.0
        %v1792 = vadd.f32 %v1733, 1.0
        %v1793 = vadd.f32 %v1735, 1.0
        %v1794 = vadd.f32 %v1737, 1.0
        %v1795 = vadd.f32 %v1739, 1.0
        %v1796 = vadd.f32 %v1741, 1.0
        %v1797 = vadd.f32 %v1743, 1.0
        %v1798 = vadd.f32 %v1745, 1.0
        %v1799 = vadd.f32 %v1747, 1.0
        %v1800 = vadd.f32 %v1749, 1.0
        %v1801 = vadd.f32 %v1751, 1.0
        %v1802 = vadd.f32 %v1753, 1.0
        %v1803 = vadd.f32 %v1755, 1.0
        %v1804 = vadd.f32 %v1757, 1.0
        %v1805 = vadd.f32 %v1759, 1.0
        %v1806 = vadd.f32 %v1761, 1.0
        %v1807 = vadd.f32 %v1763, 1.0
        %v1808 = vadd.f32 %v1765, 1.0
        %v1809 = vadd.f32 %v1767, 1.0
        %v1810 = vadd.f32 %v1769, 1.0
        %v1811 = vadd.f32 %v1771, 1.0
        %v1812 = vadd.f32 %v1773, 1.0
        %v1813 = vadd.f32 %v1775, 1.0
        %v1814 = vadd.f32 %v1777, 1.0
        %v1815 = vadd.f32 %v1779, 1.0
        %v1816 = vadd.f32 %v1781, 1.0
        %v1817 = vadd.f32 %v1783, 1.0
        %v1818 = vadd.f32 %v1785, 1.0
        %v1819 = vadd.f32 %v1787, 1.0
        %v1820 = vrcp.pop %v1788
        %v1821 = vmul.f32 1.0, %v1820
        %v1822 = vrcp.pop %v1789
        %v1823 = vmul.f32 1.0, %v1822
        %v1824 = vrcp.pop %v1790
        %v1825 = vmul.f32 1.0, %v1824
        %v1826 = vrcp.pop %v1791
        %v1827 = vmul.f32 1.0, %v1826
        %v1828 = vrcp.pop %v1792
        %v1829 = vmul.f32 1.0, %v1828
        %v1830 = vrcp.pop %v1793
        %v1831 = vmul.f32 1.0, %v1830
        %v1832 = vrcp.pop %v1794
        %v1833 = vmul.f32 1.0, %v1832
        %v1834 = vrcp.pop %v1795
        %v1835 = vmul.f32 1.0, %v1834
        %v1836 = vrcp.pop %v1796
        %v1837 = vmul.f32 1.0, %v1836
        %v1838 = vrcp.pop %v1797
        %v1839 = vmul.f32 1.0, %v1838
        %v1840 = vrcp.pop %v1798
        %v1841 = vmul.f32 1.0, %v1840
        %v1842 = vrcp.pop %v1799
        %v1843 = vmul.f32 1.0, %v1842
        %v1844 = vrcp.pop %v1800
        %v1845 = vmul.f32 1.0, %v1844
        %v1846 = vrcp.pop %v1801
        %v1847 = vmul.f32 1.0, %v1846
        %v1848 = vrcp.pop %v1802
        %v1849 = vmul.f32 1.0, %v1848
        %v1850 = vrcp.pop %v1803
        %v1851 = vmul.f32 1.0, %v1850
        %v1852 = vrcp.pop %v1804
        %v1853 = vmul.f32 1.0, %v1852
        %v1854 = vrcp.pop %v1805
        %v1855 = vmul.f32 1.0, %v1854
        %v1856 = vrcp.pop %v1806
        %v1857 = vmul.f32 1.0, %v1856
        %v1858 = vrcp.pop %v1807
        %v1859 = vmul.f32 1.0, %v1858
        %v1860 = vrcp.pop %v1808
        %v1861 = vmul.f32 1.0, %v1860
        %v1862 = vrcp.pop %v1809
        %v1863 = vmul.f32 1.0, %v1862
        %v1864 = vrcp.pop %v1810
        %v1865 = vmul.f32 1.0, %v1864
        %v1866 = vrcp.pop %v1811
        %v1867 = vmul.f32 1.0, %v1866
        %v1868 = vrcp.pop %v1812
        %v1869 = vmul.f32 1.0, %v1868
        %v1870 = vrcp.pop %v1813
        %v1871 = vmul.f32 1.0, %v1870
        %v1872 = vrcp.pop %v1814
        %v1873 = vmul.f32 1.0, %v1872
        %v1874 = vrcp.pop %v1815
        %v1875 = vmul.f32 1.0, %v1874
        %v1876 = vrcp.pop %v1816
        %v1877 = vmul.f32 1.0, %v1876
        %v1878 = vrcp.pop %v1817
        %v1879 = vmul.f32 1.0, %v1878
        %v1880 = vrcp.pop %v1818
        %v1881 = vmul.f32 1.0, %v1880
        %v1882 = vrcp.pop %v1819
        %v1883 = vmul.f32 1.0, %v1882
        %vm1884 = vcmask 7168
        %1885 = vst.msk [vmem:[%s389] sm:$0xff] %vm1884, %v1821
        %1886 = vst.msk [vmem:[%s389 + $0x8] sm:$0xff] %vm1884, %v1823
        %1887 = vst.msk [vmem:[%s389 + $0x10] sm:$0xff] %vm1884, %v1825
        %1888 = vst.msk [vmem:[%s389 + $0x18] sm:$0xff] %vm1884, %v1827
        %1889 = vst.msk [vmem:[%s389 + $0x20] sm:$0xff] %vm1884, %v1829
        %1890 = vst.msk [vmem:[%s389 + $0x28] sm:$0xff] %vm1884, %v1831
        %1891 = vst.msk [vmem:[%s389 + $0x30] sm:$0xff] %vm1884, %v1833
        %1892 = vst.msk [vmem:[%s389 + $0x38] sm:$0xff] %vm1884, %v1835
        %1893 = vst.msk [vmem:[%s389 + $0x40] sm:$0xff] %vm1884, %v1837
        %1894 = vst.msk [vmem:[%s389 + $0x48] sm:$0xff] %vm1884, %v1839
        %1895 = vst.msk [vmem:[%s389 + $0x50] sm:$0xff] %vm1884, %v1841
        %1896 = vst.msk [vmem:[%s389 + $0x58] sm:$0xff] %vm1884, %v1843
        %1897 = vst.msk [vmem:[%s389 + $0x60] sm:$0xff] %vm1884, %v1845
        %1898 = vst.msk [vmem:[%s389 + $0x68] sm:$0xff] %vm1884, %v1847
        %1899 = vst.msk [vmem:[%s389 + $0x70] sm:$0xff] %vm1884, %v1849
        %1900 = vst.msk [vmem:[%s389 + $0x78] sm:$0xff] %vm1884, %v1851
        %1901 = vst.msk [vmem:[%s389 + $0x80] sm:$0xff] %vm1884, %v1853
        %1902 = vst.msk [vmem:[%s389 + $0x88] sm:$0xff] %vm1884, %v1855
        %1903 = vst.msk [vmem:[%s389 + $0x90] sm:$0xff] %vm1884, %v1857
        %1904 = vst.msk [vmem:[%s389 + $0x98] sm:$0xff] %vm1884, %v1859
        %1905 = vst.msk [vmem:[%s389 + $0xa0] sm:$0xff] %vm1884, %v1861
        %1906 = vst.msk [vmem:[%s389 + $0xa8] sm:$0xff] %vm1884, %v1863
        %1907 = vst.msk [vmem:[%s389 + $0xb0] sm:$0xff] %vm1884, %v1865
        %1908 = vst.msk [vmem:[%s389 + $0xb8] sm:$0xff] %vm1884, %v1867
        %1909 = vst.msk [vmem:[%s389 + $0xc0] sm:$0xff] %vm1884, %v1869
        %1910 = vst.msk [vmem:[%s389 + $0xc8] sm:$0xff] %vm1884, %v1871
        %1911 = vst.msk [vmem:[%s389 + $0xd0] sm:$0xff] %vm1884, %v1873
        %1912 = vst.msk [vmem:[%s389 + $0xd8] sm:$0xff] %vm1884, %v1875
        %1913 = vst.msk [vmem:[%s389 + $0xe0] sm:$0xff] %vm1884, %v1877
        %1914 = vst.msk [vmem:[%s389 + $0xe8] sm:$0xff] %vm1884, %v1879
        %1915 = vst.msk [vmem:[%s389 + $0xf0] sm:$0xff] %vm1884, %v1881
        %1916 = vst.msk [vmem:[%s389 + $0xf8] sm:$0xff] %vm1884, %v1883
        %s1917 = sand.u32 %s267, 1
        %s1918 = sand.u32 %s267, 1
        %s1919 = smul.addr %s1918, 256
        %s1920 = scalar_lea.vmem [#allocation3], %s1919
        // Predicated region
        $region65: #{tpu_custom_call.1} parent=63 // pred_check
          %p1921 = pneg %p277
        $region66: #{tpu_custom_call.1} parent=63 // pred_check_branch
          %1923 = sbr.rel (%p1921) target = $region68
        $region67: #{tpu_custom_call.1} parent=63 // pred_region
          %s1924 = smul.u32 32, %s23
          %s1925 = ssub.s32 38, %s1924
          %p1926 = scmp.lt.s32.totalorder %s1925, 32
          %s1927 = scalar_select %p1926, %s1925, 32
          %s1928 = smul.u32 128, %s1927
          %p1929 = scmp.ne.s32.totalorder 0, %s1928
          %s1930 = smul.addr %s1924, 8
          %s1931 = scalar_lea.vmem %s11, %s1930
          // Predicated region
          $region69: #{tpu_custom_call.1} parent=67 // pred_check
            %p1932 = pneg %p1929
          $region70: #{tpu_custom_call.1} parent=67 // pred_check_branch
            %1934 = sbr.rel (%p1932) target = $region72
          $region71: #{tpu_custom_call.1} parent=67 // pred_region
            // Predicated region
            $region73: #{tpu_custom_call.1} parent=71 // pred_check
              _
            $region74: #{tpu_custom_call.1} parent=71 // pred_check_branch
              %1936 = sbr.rel (0) target = $region76
            $region75: #{tpu_custom_call.1} parent=71 // pred_region
              // Predicated region
              $region95: #{tpu_custom_call.1} parent=75 // pred_check
                _
              $region96: #{tpu_custom_call.1} parent=75 // pred_check_branch
                %2047 = sbr.rel (0) target = $region98
              $region97: #{tpu_custom_call.1} parent=75 // pred_region
                %s2048 = sshrl.u32 %s1927, 5
                // While loop
                $region99: #{tpu_custom_call.1} parent=97 // loop_pre_header
                  _
                $region100: #{tpu_custom_call.1} parent=97 // loop_header
                  %s2050 = sphi 0, %s2052
                  %p2051 = scmp.ge.s32.totalorder %s2050, %s2048
                  %s2055 = sphi 0, %s2124
                  %s2056 = sphi %s1920, %s2127
                  %s2057 = sphi %s1931, %s2128
                $region101: #{tpu_custom_call.1} parent=97 // loop_header_branch
                  %2054 = sbr.rel (%p2051) target = $region105
                $region102: #{tpu_custom_call.1} parent=97 // loop_body
                  %v2058 = vld [vmem:[%s2056] sm:$0xff]
                  %2059 = vst [vmem:[%s2057] sm:$0xff] %v2058
                  %v2060 = vld [vmem:[%s2056 + $0x8] sm:$0xff]
                  %2061 = vst [vmem:[%s2057 + $0x8] sm:$0xff] %v2060
                  %v2062 = vld [vmem:[%s2056 + $0x10] sm:$0xff]
                  %2063 = vst [vmem:[%s2057 + $0x10] sm:$0xff] %v2062
                  %v2064 = vld [vmem:[%s2056 + $0x18] sm:$0xff]
                  %2065 = vst [vmem:[%s2057 + $0x18] sm:$0xff] %v2064
                  %v2066 = vld [vmem:[%s2056 + $0x20] sm:$0xff]
                  %2067 = vst [vmem:[%s2057 + $0x20] sm:$0xff] %v2066
                  %v2068 = vld [vmem:[%s2056 + $0x28] sm:$0xff]
                  %2069 = vst [vmem:[%s2057 + $0x28] sm:$0xff] %v2068
                  %v2070 = vld [vmem:[%s2056 + $0x30] sm:$0xff]
                  %2071 = vst [vmem:[%s2057 + $0x30] sm:$0xff] %v2070
                  %v2072 = vld [vmem:[%s2056 + $0x38] sm:$0xff]
                  %2073 = vst [vmem:[%s2057 + $0x38] sm:$0xff] %v2072
                  %v2074 = vld [vmem:[%s2056 + $0x40] sm:$0xff]
                  %2075 = vst [vmem:[%s2057 + $0x40] sm:$0xff] %v2074
                  %v2076 = vld [vmem:[%s2056 + $0x48] sm:$0xff]
                  %2077 = vst [vmem:[%s2057 + $0x48] sm:$0xff] %v2076
                  %v2078 = vld [vmem:[%s2056 + $0x50] sm:$0xff]
                  %2079 = vst [vmem:[%s2057 + $0x50] sm:$0xff] %v2078
                  %v2080 = vld [vmem:[%s2056 + $0x58] sm:$0xff]
                  %2081 = vst [vmem:[%s2057 + $0x58] sm:$0xff] %v2080
                  %v2082 = vld [vmem:[%s2056 + $0x60] sm:$0xff]
                  %2083 = vst [vmem:[%s2057 + $0x60] sm:$0xff] %v2082
                  %v2084 = vld [vmem:[%s2056 + $0x68] sm:$0xff]
                  %2085 = vst [vmem:[%s2057 + $0x68] sm:$0xff] %v2084
                  %v2086 = vld [vmem:[%s2056 + $0x70] sm:$0xff]
                  %2087 = vst [vmem:[%s2057 + $0x70] sm:$0xff] %v2086
                  %v2088 = vld [vmem:[%s2056 + $0x78] sm:$0xff]
                  %2089 = vst [vmem:[%s2057 + $0x78] sm:$0xff] %v2088
                  %v2090 = vld [vmem:[%s2056 + $0x80] sm:$0xff]
                  %2091 = vst [vmem:[%s2057 + $0x80] sm:$0xff] %v2090
                  %v2092 = vld [vmem:[%s2056 + $0x88] sm:$0xff]
                  %2093 = vst [vmem:[%s2057 + $0x88] sm:$0xff] %v2092
                  %v2094 = vld [vmem:[%s2056 + $0x90] sm:$0xff]
                  %2095 = vst [vmem:[%s2057 + $0x90] sm:$0xff] %v2094
                  %v2096 = vld [vmem:[%s2056 + $0x98] sm:$0xff]
                  %2097 = vst [vmem:[%s2057 + $0x98] sm:$0xff] %v2096
                  %v2098 = vld [vmem:[%s2056 + $0xa0] sm:$0xff]
                  %2099 = vst [vmem:[%s2057 + $0xa0] sm:$0xff] %v2098
                  %v2100 = vld [vmem:[%s2056 + $0xa8] sm:$0xff]
                  %2101 = vst [vmem:[%s2057 + $0xa8] sm:$0xff] %v2100
                  %v2102 = vld [vmem:[%s2056 + $0xb0] sm:$0xff]
                  %2103 = vst [vmem:[%s2057 + $0xb0] sm:$0xff] %v2102
                  %v2104 = vld [vmem:[%s2056 + $0xb8] sm:$0xff]
                  %2105 = vst [vmem:[%s2057 + $0xb8] sm:$0xff] %v2104
                  %v2106 = vld [vmem:[%s2056 + $0xc0] sm:$0xff]
                  %2107 = vst [vmem:[%s2057 + $0xc0] sm:$0xff] %v2106
                  %v2108 = vld [vmem:[%s2056 + $0xc8] sm:$0xff]
                  %2109 = vst [vmem:[%s2057 + $0xc8] sm:$0xff] %v2108
                  %v2110 = vld [vmem:[%s2056 + $0xd0] sm:$0xff]
                  %2111 = vst [vmem:[%s2057 + $0xd0] sm:$0xff] %v2110
                  %v2112 = vld [vmem:[%s2056 + $0xd8] sm:$0xff]
                  %2113 = vst [vmem:[%s2057 + $0xd8] sm:$0xff] %v2112
                  %v2114 = vld [vmem:[%s2056 + $0xe0] sm:$0xff]
                  %2115 = vst [vmem:[%s2057 + $0xe0] sm:$0xff] %v2114
                  %v2116 = vld [vmem:[%s2056 + $0xe8] sm:$0xff]
                  %2117 = vst [vmem:[%s2057 + $0xe8] sm:$0xff] %v2116
                  %v2118 = vld [vmem:[%s2056 + $0xf0] sm:$0xff]
                  %2119 = vst [vmem:[%s2057 + $0xf0] sm:$0xff] %v2118
                  %v2120 = vld [vmem:[%s2056 + $0xf8] sm:$0xff]
                  %2121 = vst [vmem:[%s2057 + $0xf8] sm:$0xff] %v2120
                  %s2122 = sadd.s32 1, %s2055
                  %p2123 = scmp.ge.s32.totalorder %s2122, %s2048
                  %s2124 = scalar_select %p2123, 0, %s2122
                  %s2125 = smul.u32 %s2124, 256
                  %s2126 = smul.u32 %s2124, 256
                  %s2127 = scalar_lea.vmem %s1920, %s2125 [#allocation3]
                  %s2128 = scalar_lea.vmem %s1931, %s2126
                $region103: #{tpu_custom_call.1} parent=97 // loop_footer
                  %s2052 = sadd.s32 %s2050, 1
                $region104: #{tpu_custom_call.1} parent=97 // loop_footer_branch
                  %2049 = sbr.rel target = $region100
                $region105: #{tpu_custom_call.1} parent=97 // loop_exit
                  _
                %s2129 = sshrl.u32 %s1927, 5
                %s2130 = sand.u32 %s1927, 31
                %s2131 = smul.u32 %s2129, 32
                %s2132 = smul.u32 8, %s2131
                %s2133 = scalar_lea.vmem %s1920, %s2132 [#allocation3]
                %s2134 = smul.u32 8, %s2131
                %s2135 = scalar_lea.vmem %s1931, %s2134
                // While loop
                $region106: #{tpu_custom_call.1} parent=97 // loop_pre_header
                  _
                $region107: #{tpu_custom_call.1} parent=97 // loop_header
                  %s2137 = sphi 0, %s2139
                  %p2138 = scmp.ge.s32.totalorder %s2137, %s2130
                  %s2142 = sphi 0, %s2149
                  %s2143 = sphi %s2133, %s2152
                  %s2144 = sphi %s2135, %s2153
                $region108: #{tpu_custom_call.1} parent=97 // loop_header_branch
                  %2141 = sbr.rel (%p2138) target = $region112
                $region109: #{tpu_custom_call.1} parent=97 // loop_body
                  %v2145 = vld [vmem:[%s2143] sm:$0xff]
                  %2146 = vst [vmem:[%s2144] sm:$0xff] %v2145
                  %s2147 = sadd.s32 1, %s2142
                  %p2148 = scmp.ge.s32.totalorder %s2147, %s2130
                  %s2149 = scalar_select %p2148, 0, %s2147
                  %s2150 = smul.u32 %s2149, 8
                  %s2151 = smul.u32 %s2149, 8
                  %s2152 = scalar_lea.vmem %s2133, %s2150 [#allocation3]
                  %s2153 = scalar_lea.vmem %s2135, %s2151
                $region110: #{tpu_custom_call.1} parent=97 // loop_footer
                  %s2139 = sadd.s32 %s2137, 1
                $region111: #{tpu_custom_call.1} parent=97 // loop_footer_branch
                  %2136 = sbr.rel target = $region107
                $region112: #{tpu_custom_call.1} parent=97 // loop_exit
                  _
              $region98: #{tpu_custom_call.1} parent=75 // pred_fallthru
                _
              // Predicated region
              $region113: #{tpu_custom_call.1} parent=75 // pred_check
                _
              $region114: #{tpu_custom_call.1} parent=75 // pred_check_branch
                %2155 = sbr.rel target = $region116
              $region115: #{tpu_custom_call.1} parent=75 // pred_region
                _
              $region116: #{tpu_custom_call.1} parent=75 // pred_fallthru
                _
            $region76: #{tpu_custom_call.1} parent=71 // pred_fallthru
              _
            // Predicated region
            $region77: #{tpu_custom_call.1} parent=71 // pred_check
              _
            $region78: #{tpu_custom_call.1} parent=71 // pred_check_branch
              %1938 = sbr.rel target = $region80
            $region79: #{tpu_custom_call.1} parent=71 // pred_region
              %s1940 = sshrl.u32 %s1927, 5
              // While loop
              $region81: #{tpu_custom_call.1} parent=79 // loop_pre_header
                _
              $region82: #{tpu_custom_call.1} parent=79 // loop_header
                %s1942 = sphi 0, %s1944
                %p1943 = scmp.ge.s32.totalorder %s1942, %s1940
                %s1947 = sphi 0, %s2016
                %s1948 = sphi %s1920, %s2019
                %s1949 = sphi %s1931, %s2020
              $region83: #{tpu_custom_call.1} parent=79 // loop_header_branch
                %1946 = sbr.rel (%p1943) target = $region87
              $region84: #{tpu_custom_call.1} parent=79 // loop_body
                %v1950 = vld [vmem:[%s1948] sm:$0xff]
                %1951 = vst [vmem:[%s1949] sm:$0xff] %v1950
                %v1952 = vld [vmem:[%s1948 + $0x8] sm:$0xff]
                %1953 = vst [vmem:[%s1949 + $0x8] sm:$0xff] %v1952
                %v1954 = vld [vmem:[%s1948 + $0x10] sm:$0xff]
                %1955 = vst [vmem:[%s1949 + $0x10] sm:$0xff] %v1954
                %v1956 = vld [vmem:[%s1948 + $0x18] sm:$0xff]
                %1957 = vst [vmem:[%s1949 + $0x18] sm:$0xff] %v1956
                %v1958 = vld [vmem:[%s1948 + $0x20] sm:$0xff]
                %1959 = vst [vmem:[%s1949 + $0x20] sm:$0xff] %v1958
                %v1960 = vld [vmem:[%s1948 + $0x28] sm:$0xff]
                %1961 = vst [vmem:[%s1949 + $0x28] sm:$0xff] %v1960
                %v1962 = vld [vmem:[%s1948 + $0x30] sm:$0xff]
                %1963 = vst [vmem:[%s1949 + $0x30] sm:$0xff] %v1962
                %v1964 = vld [vmem:[%s1948 + $0x38] sm:$0xff]
                %1965 = vst [vmem:[%s1949 + $0x38] sm:$0xff] %v1964
                %v1966 = vld [vmem:[%s1948 + $0x40] sm:$0xff]
                %1967 = vst [vmem:[%s1949 + $0x40] sm:$0xff] %v1966
                %v1968 = vld [vmem:[%s1948 + $0x48] sm:$0xff]
                %1969 = vst [vmem:[%s1949 + $0x48] sm:$0xff] %v1968
                %v1970 = vld [vmem:[%s1948 + $0x50] sm:$0xff]
                %1971 = vst [vmem:[%s1949 + $0x50] sm:$0xff] %v1970
                %v1972 = vld [vmem:[%s1948 + $0x58] sm:$0xff]
                %1973 = vst [vmem:[%s1949 + $0x58] sm:$0xff] %v1972
                %v1974 = vld [vmem:[%s1948 + $0x60] sm:$0xff]
                %1975 = vst [vmem:[%s1949 + $0x60] sm:$0xff] %v1974
                %v1976 = vld [vmem:[%s1948 + $0x68] sm:$0xff]
                %1977 = vst [vmem:[%s1949 + $0x68] sm:$0xff] %v1976
                %v1978 = vld [vmem:[%s1948 + $0x70] sm:$0xff]
                %1979 = vst [vmem:[%s1949 + $0x70] sm:$0xff] %v1978
                %v1980 = vld [vmem:[%s1948 + $0x78] sm:$0xff]
                %1981 = vst [vmem:[%s1949 + $0x78] sm:$0xff] %v1980
                %v1982 = vld [vmem:[%s1948 + $0x80] sm:$0xff]
                %1983 = vst [vmem:[%s1949 + $0x80] sm:$0xff] %v1982
                %v1984 = vld [vmem:[%s1948 + $0x88] sm:$0xff]
                %1985 = vst [vmem:[%s1949 + $0x88] sm:$0xff] %v1984
                %v1986 = vld [vmem:[%s1948 + $0x90] sm:$0xff]
                %1987 = vst [vmem:[%s1949 + $0x90] sm:$0xff] %v1986
                %v1988 = vld [vmem:[%s1948 + $0x98] sm:$0xff]
                %1989 = vst [vmem:[%s1949 + $0x98] sm:$0xff] %v1988
                %v1990 = vld [vmem:[%s1948 + $0xa0] sm:$0xff]
                %1991 = vst [vmem:[%s1949 + $0xa0] sm:$0xff] %v1990
                %v1992 = vld [vmem:[%s1948 + $0xa8] sm:$0xff]
                %1993 = vst [vmem:[%s1949 + $0xa8] sm:$0xff] %v1992
                %v1994 = vld [vmem:[%s1948 + $0xb0] sm:$0xff]
                %1995 = vst [vmem:[%s1949 + $0xb0] sm:$0xff] %v1994
                %v1996 = vld [vmem:[%s1948 + $0xb8] sm:$0xff]
                %1997 = vst [vmem:[%s1949 + $0xb8] sm:$0xff] %v1996
                %v1998 = vld [vmem:[%s1948 + $0xc0] sm:$0xff]
                %1999 = vst [vmem:[%s1949 + $0xc0] sm:$0xff] %v1998
                %v2000 = vld [vmem:[%s1948 + $0xc8] sm:$0xff]
                %2001 = vst [vmem:[%s1949 + $0xc8] sm:$0xff] %v2000
                %v2002 = vld [vmem:[%s1948 + $0xd0] sm:$0xff]
                %2003 = vst [vmem:[%s1949 + $0xd0] sm:$0xff] %v2002
                %v2004 = vld [vmem:[%s1948 + $0xd8] sm:$0xff]
                %2005 = vst [vmem:[%s1949 + $0xd8] sm:$0xff] %v2004
                %v2006 = vld [vmem:[%s1948 + $0xe0] sm:$0xff]
                %2007 = vst [vmem:[%s1949 + $0xe0] sm:$0xff] %v2006
                %v2008 = vld [vmem:[%s1948 + $0xe8] sm:$0xff]
                %2009 = vst [vmem:[%s1949 + $0xe8] sm:$0xff] %v2008
                %v2010 = vld [vmem:[%s1948 + $0xf0] sm:$0xff]
                %2011 = vst [vmem:[%s1949 + $0xf0] sm:$0xff] %v2010
                %v2012 = vld [vmem:[%s1948 + $0xf8] sm:$0xff]
                %2013 = vst [vmem:[%s1949 + $0xf8] sm:$0xff] %v2012
                %s2014 = sadd.s32 1, %s1947
                %p2015 = scmp.ge.s32.totalorder %s2014, %s1940
                %s2016 = scalar_select %p2015, 0, %s2014
                %s2017 = smul.u32 %s2016, 256
                %s2018 = smul.u32 %s2016, 256
                %s2019 = scalar_lea.vmem %s1920, %s2017 [#allocation3]
                %s2020 = scalar_lea.vmem %s1931, %s2018
              $region85: #{tpu_custom_call.1} parent=79 // loop_footer
                %s1944 = sadd.s32 %s1942, 1
              $region86: #{tpu_custom_call.1} parent=79 // loop_footer_branch
                %1941 = sbr.rel target = $region82
              $region87: #{tpu_custom_call.1} parent=79 // loop_exit
                _
              %s2021 = sshrl.u32 %s1927, 5
              %s2022 = sand.u32 %s1927, 31
              %s2023 = smul.u32 %s2021, 32
              %s2024 = smul.u32 8, %s2023
              %s2025 = scalar_lea.vmem %s1920, %s2024 [#allocation3]
              %s2026 = smul.u32 8, %s2023
              %s2027 = scalar_lea.vmem %s1931, %s2026
              // While loop
              $region88: #{tpu_custom_call.1} parent=79 // loop_pre_header
                _
              $region89: #{tpu_custom_call.1} parent=79 // loop_header
                %s2029 = sphi 0, %s2031
                %p2030 = scmp.ge.s32.totalorder %s2029, %s2022
                %s2034 = sphi 0, %s2041
                %s2035 = sphi %s2025, %s2044
                %s2036 = sphi %s2027, %s2045
              $region90: #{tpu_custom_call.1} parent=79 // loop_header_branch
                %2033 = sbr.rel (%p2030) target = $region94
              $region91: #{tpu_custom_call.1} parent=79 // loop_body
                %v2037 = vld [vmem:[%s2035] sm:$0xff]
                %2038 = vst [vmem:[%s2036] sm:$0xff] %v2037
                %s2039 = sadd.s32 1, %s2034
                %p2040 = scmp.ge.s32.totalorder %s2039, %s2022
                %s2041 = scalar_select %p2040, 0, %s2039
                %s2042 = smul.u32 %s2041, 8
                %s2043 = smul.u32 %s2041, 8
                %s2044 = scalar_lea.vmem %s2025, %s2042 [#allocation3]
                %s2045 = scalar_lea.vmem %s2027, %s2043
              $region92: #{tpu_custom_call.1} parent=79 // loop_footer
                %s2031 = sadd.s32 %s2029, 1
              $region93: #{tpu_custom_call.1} parent=79 // loop_footer_branch
                %2028 = sbr.rel target = $region89
              $region94: #{tpu_custom_call.1} parent=79 // loop_exit
                _
            $region80: #{tpu_custom_call.1} parent=71 // pred_fallthru
              _
          $region72: #{tpu_custom_call.1} parent=67 // pred_fallthru
            _
          %2156 = vnop
        $region68: #{tpu_custom_call.1} parent=63 // pred_fallthru
          _
      $region64: #{tpu_custom_call.1} parent=5 // pred_fallthru
        _
      %p2157 = scmp.le.s32.totalorder 2, %s18
      // Predicated region
      $region117: #{tpu_custom_call.1} parent=5 // pred_check
        %p2158 = pneg %p2157
      $region118: #{tpu_custom_call.1} parent=5 // pred_check_branch
        %2160 = sbr.rel (%p2158) target = $region120
      $region119: #{tpu_custom_call.1} parent=5 // pred_region
        %s2161 = ssub.s32 %s18, 2
        // Predicated region
        $region121: #{tpu_custom_call.1} parent=119 // pred_check
          %p2162 = pneg %p283
        $region122: #{tpu_custom_call.1} parent=119 // pred_check_branch
          %2164 = sbr.rel (%p2162) target = $region124
        $region123: #{tpu_custom_call.1} parent=119 // pred_region
          %s2165 = sand.u32 %s268, 1
          %s2166 = sand.u32 %s268, 1
          %s2167 = smul.addr %s2166, 256
          %s2168 = scalar_lea.vmem [#allocation3], %s2167
        $region124: #{tpu_custom_call.1} parent=119 // pred_fallthru
          _
      $region120: #{tpu_custom_call.1} parent=5 // pred_fallthru
        _
    $region6: #{tpu_custom_call.1} parent=1 // loop_footer
      %s22 = sadd.s32 1, %s18
    $region7: #{tpu_custom_call.1} parent=1 // loop_footer_branch
      %17 = sbr.rel target = $region3
    $region8: #{tpu_custom_call.1} parent=1 // loop_exit
      _

</llo_original>
